<compile_context>
chip_gen: v6e
topology: v6e:2x2x1
jax: 0.10.0
libtpu: 0.0.40
codegen_flags: <defaults>
</compile_context>

<pallas_src>
import functools

import jax
import jax.numpy as jnp
from jax.experimental import pallas as pl
from jax.experimental.pallas import tpu as pltpu


def _last_layer_kernel(H, dk, q_ref, k_ref, wq_ref, bq_ref, wk_ref, bk_ref,
                       o_ref, ka_ref):
    # q_ref : (1, TL, D)   current L tile of this batch's queries
    # k_ref : (1, S, D)    this batch's keys (block index constant over l)
    # wq/wk : (D, H*dk)    fused projection slabs (scale folded into wq)
    # bq/bk : (1, H*dk)    fused biases (kept f32; added to f32 accumulator)
    # o_ref : (1, H, TL, S)
    # ka_ref: (S, H*dk)    VMEM scratch, persists across the L tiles of a batch

    # K projection: once per batch (first L tile only), cached in scratch.
    @pl.when(pl.program_id(1) == 0)
    def _():
        ka = jnp.dot(k_ref[0], wk_ref[...],
                     preferred_element_type=jnp.float32) + bk_ref[...]
        ka_ref[...] = ka.astype(ka_ref.dtype)

    # Q projection for this L tile: one lane-dense (N = H*dk) MXU pass.
    qa = jnp.dot(q_ref[0], wq_ref[...],
                 preferred_element_type=jnp.float32) + bq_ref[...]
    qa = qa.astype(ka_ref.dtype)          # MXU operand dtype (bf16 in prod)
    ka = ka_ref[...]

    # Per-head QK^T, contracting the last axes directly (no K transpose);
    # each head's (TL, S) tile is stored immediately -> no concat/relayout.
    for h in range(H):
        d = jax.lax.dot_general(
            qa[:, h * dk:(h + 1) * dk], ka[:, h * dk:(h + 1) * dk],
            dimension_numbers=(((1,), (1,)), ((), ())),
            preferred_element_type=jnp.float32)        # (TL, S) in f32
        o_ref[0, h] = d.astype(o_ref.dtype)


def _invariant_spec(shape, single_buffer):
    """BlockSpec for a grid-invariant operand (constant index_map)."""
    index_map = lambda b, l: (0,) * len(shape)
    if single_buffer:
        # Data never changes across the grid -> no exposed DMA, 1 buffer.
        return pl.BlockSpec(shape, index_map, pipeline_mode=pl.Buffered(1))
    return pl.BlockSpec(shape, index_map)


def _last_layer_call(queries, keys, wq_all, bq2, wk_all, bk2, H, dk, tile_l,
                     single_buffer_weights):
    B, L, D = queries.shape
    _, S, _ = keys.shape
    HDK = H * dk
    nl = L // tile_l

    kernel = functools.partial(_last_layer_kernel, H, dk)

    in_bytes = queries.dtype.itemsize
    flops = 2 * B * (L * D * HDK + S * D * HDK + H * L * S * dk)
    bytes_accessed = (in_bytes * (B * L * D + B * S * D + 2 * D * HDK)
                      + 4 * (2 * HDK + B * H * L * S))

    return pl.pallas_call(
        kernel,
        out_shape=jax.ShapeDtypeStruct((B, H, L, S), jnp.float32),
        grid_spec=pltpu.PrefetchScalarGridSpec(
            num_scalar_prefetch=0,
            grid=(B, nl),
            in_specs=[
                pl.BlockSpec((1, tile_l, D), lambda b, l: (b, l, 0)),  # q tile
                pl.BlockSpec((1, S, D), lambda b, l: (b, 0, 0)),       # keys[b]
                _invariant_spec((D, HDK), single_buffer_weights),      # Wq slab
                _invariant_spec((1, HDK), single_buffer_weights),      # bq
                _invariant_spec((D, HDK), single_buffer_weights),      # Wk slab
                _invariant_spec((1, HDK), single_buffer_weights),      # bk
            ],
            out_specs=pl.BlockSpec((1, H, tile_l, S),
                                   lambda b, l: (b, 0, l, 0)),
            scratch_shapes=[pltpu.VMEM((S, HDK), queries.dtype)],      # K cache
        ),
        compiler_params=pltpu.CompilerParams(
            dimension_semantics=("parallel", "arbitrary")),
        cost_estimate=pl.CostEstimate(
            flops=flops, transcendentals=0, bytes_accessed=bytes_accessed),
    )(queries, keys, wq_all, bq2, wk_all, bk2)


def last_layer_forward(queries, keys, wq_all, bq_all, wk_all, bk_all, n_heads,
                       *, tile_l=None, compute_dtype=jnp.float32):
    """queries: (B, L, D); keys: (B, S, D)
    wq_all/wk_all: (D, H*dk) fused projection slabs, already transposed, with
    the attention scale folded into wq_all; bq_all/bk_all: (H*dk,) biases
    (scale folded into bq_all).  Returns dots: (B, H, L, S) in float32.
    """
    B, L, D = queries.shape
    H = n_heads
    HDK = wq_all.shape[1]
    dk = HDK // H
    if tile_l is None:
        tile_l = min(L, 128)
    assert L % tile_l == 0, "L must be divisible by tile_l"

    # MXU operands (bf16 halves weight/activation DMA bytes in production);
    # bias-add and accumulation stay f32.
    q_c = queries.astype(compute_dtype)
    k_c = keys.astype(compute_dtype)
    wq_c = wq_all.astype(compute_dtype)
    wk_c = wk_all.astype(compute_dtype)
    bq2 = bq_all.reshape(1, HDK).astype(jnp.float32)
    bk2 = bk_all.reshape(1, HDK).astype(jnp.float32)

    try:
        return _last_layer_call(q_c, k_c, wq_c, bq2, wk_c, bk2, H, dk, tile_l,
                                single_buffer_weights=True)
    except Exception:
        # Fallback for jax builds without BlockSpec pipeline_mode / Buffered(1)
        # support — identical semantics, default double buffering.
        return _last_layer_call(q_c, k_c, wq_c, bq2, wk_c, bk2, H, dk, tile_l,
                                single_buffer_weights=False)


def _make_weight_norm_params(key, out_dim, in_dim):
    """Deterministic weight-norm parameterization: w = g * v / ||v||_row."""
    kv, kg, kb = jax.random.split(key, 3)
    v = jax.random.normal(kv, (out_dim, in_dim), jnp.float32) * 0.05
    g = jax.random.uniform(kg, (out_dim, 1), jnp.float32, 0.5, 1.5)
    b = jax.random.normal(kb, (out_dim,), jnp.float32) * 0.01
    norm = jnp.sqrt(jnp.sum(v * v, axis=1, keepdims=True))
    w = g * v / norm                      # (out, in), torch weight_norm(dim=0)
    return w, b


if __name__ == "__main__":
    # Small shapes consistent with the module.
    B, L, S = 2, 16, 8
    d_model, n_heads = 32, 4
    d_keys = d_model // n_heads           # 8
    scale = float(d_keys) ** (-0.5)

    key = jax.random.PRNGKey(0)
    kq, kk, kwq, kwk = jax.random.split(key, 4)

    queries = jax.random.normal(kq, (B, L, d_model), jnp.float32)
    keys = jax.random.normal(kk, (B, S, d_model), jnp.float32)

    Wq, bq = _make_weight_norm_params(kwq, d_keys * n_heads, d_model)  # (H*dk, D)
    Wk, bk = _make_weight_norm_params(kwk, d_keys * n_heads, d_model)

    # Parameter prep (done once): fused, transposed slabs (D, H*dk).  Output
    # channel o = h*dk + j matches PyTorch's .view(B, L, H, dk) head split.
    # Attention scale is folded into the query projection here, not per call.
    wq_all = Wq.T * scale
    bq_all = bq * scale
    wk_all = Wk.T
    bk_all = bk

    # f32 MXU path (exact check) with L tiled into the grid: grid = (2, 2).
    dots = last_layer_forward(queries, keys, wq_all, bq_all, wk_all, bk_all,
                              n_heads, tile_l=8, compute_dtype=jnp.float32)
    dots = jax.block_until_ready(dots)

    # Pure-JAX reference (same semantics as the PyTorch forward).
    Qr = (queries @ Wq.T + bq).reshape(B, L, n_heads, d_keys).transpose(0, 2, 1, 3)
    Kr = (keys @ Wk.T + bk).reshape(B, S, n_heads, d_keys).transpose(0, 2, 1, 3)
    ref = jnp.einsum("bhld,bhsd->bhls", Qr, Kr) * scale
    assert dots.shape == (B, n_heads, L, S)
    assert jnp.allclose(dots, ref, atol=1e-4, rtol=1e-4)

    # bf16 MXU path (production dtype on v5e/v6e/v7x); f32 accumulation, so
    # only the operand-rounding error remains -> loose tolerance.
    dots_bf16 = last_layer_forward(queries, keys, wq_all, bq_all, wk_all,
                                   bk_all, n_heads, tile_l=16,
                                   compute_dtype=jnp.bfloat16)
    dots_bf16 = jax.block_until_ready(dots_bf16)
    assert dots_bf16.shape == (B, n_heads, L, S)
    assert jnp.allclose(dots_bf16, ref, atol=1e-1, rtol=1e-1)

    print("KERNEL_OK")
</pallas_src>

<mosaic_0001>
module attributes {stable_mosaic.version = 11 : i64} {
  func.func @_last_layer_kernel(%arg0: i32, %arg1: i32, %arg2: memref<1x8x32xf32, #tpu.memory_space<vmem>>, %arg3: memref<1x8x32xf32, #tpu.memory_space<vmem>>, %arg4: memref<32x32xf32, #tpu.memory_space<vmem>>, %arg5: memref<1x32xf32, #tpu.memory_space<vmem>>, %arg6: memref<32x32xf32, #tpu.memory_space<vmem>>, %arg7: memref<1x32xf32, #tpu.memory_space<vmem>>, %arg8: memref<1x4x8x8xf32, #tpu.memory_space<vmem>>, %arg9: memref<8x32xf32, #tpu.memory_space<vmem>>) attributes {dimension_semantics = [#tpu.dimension_semantics<parallel>, #tpu.dimension_semantics<arbitrary>], iteration_bounds = array<i64: 2, 2>, scalar_prefetch = 0 : i64, scratch_operands = 1 : i64, tpu.core_type = #tpu.core_type<tc>, window_params = [{transform_indices = @transform_0, window_bounds = array<i64: 1, 8, 32>}, {transform_indices = @transform_1, window_bounds = array<i64: 1, 8, 32>}, {pipeline_mode = #tpu.pipeline_mode<synchronous>, transform_indices = @transform_2, window_bounds = array<i64: 32, 32>}, {pipeline_mode = #tpu.pipeline_mode<synchronous>, transform_indices = @transform_3, window_bounds = array<i64: 1, 32>}, {pipeline_mode = #tpu.pipeline_mode<synchronous>, transform_indices = @transform_4, window_bounds = array<i64: 32, 32>}, {pipeline_mode = #tpu.pipeline_mode<synchronous>, transform_indices = @transform_5, window_bounds = array<i64: 1, 32>}, {transform_indices = @transform_6, window_bounds = array<i64: 1, 4, 8, 8>}]} {
    %c0_i32 = arith.constant 0 : i32
    %0 = arith.cmpi eq, %arg1, %c0_i32 : i32
    %1 = arith.extui %0 : i1 to i32
    %c0_i32_0 = arith.constant 0 : i32
    %2 = arith.cmpi ne, %1, %c0_i32_0 : i32
    scf.if %2 {
      %c0_26 = arith.constant 0 : index
      %c0_27 = arith.constant 0 : index
      %c0_28 = arith.constant 0 : index
      %35 = vector.load %arg3[%c0_26, %c0_27, %c0_28] : memref<1x8x32xf32, #tpu.memory_space<vmem>>, vector<1x8x32xf32>
      %36 = vector.shape_cast %35 : vector<1x8x32xf32> to vector<8x32xf32>
      %c0_29 = arith.constant 0 : index
      %c0_30 = arith.constant 0 : index
      %37 = vector.load %arg6[%c0_29, %c0_30] : memref<32x32xf32, #tpu.memory_space<vmem>>, vector<32x32xf32>
      %cst_31 = arith.constant dense<0.000000e+00> : vector<8x32xf32>
      %38 = tpu.matmul %36, %37, %cst_31 {dimension_numbers = #tpu.dot_dimension_numbers<[1], [0], [0], [1], [0, 0, 1, 1], [], []>} : vector<8x32xf32>, vector<32x32xf32>, vector<8x32xf32> -> vector<8x32xf32>
      %c0_32 = arith.constant 0 : index
      %c0_33 = arith.constant 0 : index
      %39 = vector.load %arg7[%c0_32, %c0_33] : memref<1x32xf32, #tpu.memory_space<vmem>>, vector<1x32xf32>
      %40 = vector.broadcast %39 : vector<1x32xf32> to vector<8x32xf32>
      %41 = arith.addf %38, %40 : vector<8x32xf32>
      %c0_34 = arith.constant 0 : index
      %c0_35 = arith.constant 0 : index
      %42 = vector.load %arg9[%c0_34, %c0_35] : memref<8x32xf32, #tpu.memory_space<vmem>>, vector<8x32xf32>
      tpu.vector_store %arg9[%c0_34, %c0_35], %41 {strides = array<i32>} : memref<8x32xf32, #tpu.memory_space<vmem>>, vector<8x32xf32>,
    } else {
    }
    %c0 = arith.constant 0 : index
    %c0_1 = arith.constant 0 : index
    %c0_2 = arith.constant 0 : index
    %3 = vector.load %arg2[%c0, %c0_1, %c0_2] : memref<1x8x32xf32, #tpu.memory_space<vmem>>, vector<1x8x32xf32>
    %4 = vector.shape_cast %3 : vector<1x8x32xf32> to vector<8x32xf32>
    %c0_3 = arith.constant 0 : index
    %c0_4 = arith.constant 0 : index
    %5 = vector.load %arg4[%c0_3, %c0_4] : memref<32x32xf32, #tpu.memory_space<vmem>>, vector<32x32xf32>
    %cst = arith.constant dense<0.000000e+00> : vector<8x32xf32>
    %6 = tpu.matmul %4, %5, %cst {dimension_numbers = #tpu.dot_dimension_numbers<[1], [0], [0], [1], [0, 0, 1, 1], [], []>} : vector<8x32xf32>, vector<32x32xf32>, vector<8x32xf32> -> vector<8x32xf32>
    %c0_5 = arith.constant 0 : index
    %c0_6 = arith.constant 0 : index
    %7 = vector.load %arg5[%c0_5, %c0_6] : memref<1x32xf32, #tpu.memory_space<vmem>>, vector<1x32xf32>
    %8 = vector.broadcast %7 : vector<1x32xf32> to vector<8x32xf32>
    %9 = arith.addf %6, %8 : vector<8x32xf32>
    %c0_7 = arith.constant 0 : index
    %c0_8 = arith.constant 0 : index
    %10 = vector.load %arg9[%c0_7, %c0_8] : memref<8x32xf32, #tpu.memory_space<vmem>>, vector<8x32xf32>
    %11 = vector.extract_strided_slice %9 {offsets = [0, 0], sizes = [8, 8], strides = [1, 1]} : vector<8x32xf32> to vector<8x8xf32>
    %12 = vector.extract_strided_slice %10 {offsets = [0, 0], sizes = [8, 8], strides = [1, 1]} : vector<8x32xf32> to vector<8x8xf32>
    %cst_9 = arith.constant dense<0.000000e+00> : vector<8x8xf32>
    %13 = tpu.matmul %11, %12, %cst_9 {dimension_numbers = #tpu.dot_dimension_numbers<[1], [1], [0], [0], [0, 0, 1, 0], [], []>} : vector<8x8xf32>, vector<8x8xf32>, vector<8x8xf32> -> vector<8x8xf32>
    %c0_10 = arith.constant 0 : index
    %c0_11 = arith.constant 0 : index
    %c0_12 = arith.constant 0 : index
    %c0_13 = arith.constant 0 : index
    %14 = vector.load %arg8[%c0_10, %c0_11, %c0_12, %c0_13] : memref<1x4x8x8xf32, #tpu.memory_space<vmem>>, vector<1x1x8x8xf32>
    %15 = vector.shape_cast %14 : vector<1x1x8x8xf32> to vector<8x8xf32>
    %16 = vector.shape_cast %13 : vector<8x8xf32> to vector<1x1x8x8xf32>
    tpu.vector_store %arg8[%c0_10, %c0_11, %c0_12, %c0_13], %16 {strides = array<i32>} : memref<1x4x8x8xf32, #tpu.memory_space<vmem>>, vector<1x1x8x8xf32>,
    %17 = vector.extract_strided_slice %9 {offsets = [0, 8], sizes = [8, 8], strides = [1, 1]} : vector<8x32xf32> to vector<8x8xf32>
    %18 = vector.extract_strided_slice %10 {offsets = [0, 8], sizes = [8, 8], strides = [1, 1]} : vector<8x32xf32> to vector<8x8xf32>
    %cst_14 = arith.constant dense<0.000000e+00> : vector<8x8xf32>
    %19 = tpu.matmul %17, %18, %cst_14 {dimension_numbers = #tpu.dot_dimension_numbers<[1], [1], [0], [0], [0, 0, 1, 0], [], []>} : vector<8x8xf32>, vector<8x8xf32>, vector<8x8xf32> -> vector<8x8xf32>
    %c0_15 = arith.constant 0 : index
    %c1 = arith.constant 1 : index
    %c0_16 = arith.constant 0 : index
    %c0_17 = arith.constant 0 : index
    %20 = vector.load %arg8[%c0_15, %c1, %c0_16, %c0_17] : memref<1x4x8x8xf32, #tpu.memory_space<vmem>>, vector<1x1x8x8xf32>
    %21 = vector.shape_cast %20 : vector<1x1x8x8xf32> to vector<8x8xf32>
    %22 = vector.shape_cast %19 : vector<8x8xf32> to vector<1x1x8x8xf32>
    tpu.vector_store %arg8[%c0_15, %c1, %c0_16, %c0_17], %22 {strides = array<i32>} : memref<1x4x8x8xf32, #tpu.memory_space<vmem>>, vector<1x1x8x8xf32>,
    %23 = vector.extract_strided_slice %9 {offsets = [0, 16], sizes = [8, 8], strides = [1, 1]} : vector<8x32xf32> to vector<8x8xf32>
    %24 = vector.extract_strided_slice %10 {offsets = [0, 16], sizes = [8, 8], strides = [1, 1]} : vector<8x32xf32> to vector<8x8xf32>
    %cst_18 = arith.constant dense<0.000000e+00> : vector<8x8xf32>
    %25 = tpu.matmul %23, %24, %cst_18 {dimension_numbers = #tpu.dot_dimension_numbers<[1], [1], [0], [0], [0, 0, 1, 0], [], []>} : vector<8x8xf32>, vector<8x8xf32>, vector<8x8xf32> -> vector<8x8xf32>
    %c0_19 = arith.constant 0 : index
    %c2 = arith.constant 2 : index
    %c0_20 = arith.constant 0 : index
    %c0_21 = arith.constant 0 : index
    %26 = vector.load %arg8[%c0_19, %c2, %c0_20, %c0_21] : memref<1x4x8x8xf32, #tpu.memory_space<vmem>>, vector<1x1x8x8xf32>
    %27 = vector.shape_cast %26 : vector<1x1x8x8xf32> to vector<8x8xf32>
    %28 = vector.shape_cast %25 : vector<8x8xf32> to vector<1x1x8x8xf32>
    tpu.vector_store %arg8[%c0_19, %c2, %c0_20, %c0_21], %28 {strides = array<i32>} : memref<1x4x8x8xf32, #tpu.memory_space<vmem>>, vector<1x1x8x8xf32>,
    %29 = vector.extract_strided_slice %9 {offsets = [0, 24], sizes = [8, 8], strides = [1, 1]} : vector<8x32xf32> to vector<8x8xf32>
    %30 = vector.extract_strided_slice %10 {offsets = [0, 24], sizes = [8, 8], strides = [1, 1]} : vector<8x32xf32> to vector<8x8xf32>
    %cst_22 = arith.constant dense<0.000000e+00> : vector<8x8xf32>
    %31 = tpu.matmul %29, %30, %cst_22 {dimension_numbers = #tpu.dot_dimension_numbers<[1], [1], [0], [0], [0, 0, 1, 0], [], []>} : vector<8x8xf32>, vector<8x8xf32>, vector<8x8xf32> -> vector<8x8xf32>
    %c0_23 = arith.constant 0 : index
    %c3 = arith.constant 3 : index
    %c0_24 = arith.constant 0 : index
    %c0_25 = arith.constant 0 : index
    %32 = vector.load %arg8[%c0_23, %c3, %c0_24, %c0_25] : memref<1x4x8x8xf32, #tpu.memory_space<vmem>>, vector<1x1x8x8xf32>
    %33 = vector.shape_cast %32 : vector<1x1x8x8xf32> to vector<8x8xf32>
    %34 = vector.shape_cast %31 : vector<8x8xf32> to vector<1x1x8x8xf32>
    tpu.vector_store %arg8[%c0_23, %c3, %c0_24, %c0_25], %34 {strides = array<i32>} : memref<1x4x8x8xf32, #tpu.memory_space<vmem>>, vector<1x1x8x8xf32>,
    return
  }
  func.func @transform_0(%arg0: i32, %arg1: i32) -> (i32, i32, i32) {
    %c0_i32 = arith.constant 0 : i32
    %c0_i32_0 = arith.constant 0 : i32
    return %arg0, %arg1, %c0_i32 : i32, i32, i32
  }
  func.func @transform_1(%arg0: i32, %arg1: i32) -> (i32, i32, i32) {
    %c0_i32 = arith.constant 0 : i32
    %c0_i32_0 = arith.constant 0 : i32
    %c0_i32_1 = arith.constant 0 : i32
    return %arg0, %c0_i32, %c0_i32_0 : i32, i32, i32
  }
  func.func @transform_2(%arg0: i32, %arg1: i32) -> (i32, i32) {
    %c0_i32 = arith.constant 0 : i32
    %c0_i32_0 = arith.constant 0 : i32
    %c0_i32_1 = arith.constant 0 : i32
    return %c0_i32, %c0_i32_0 : i32, i32
  }
  func.func @transform_3(%arg0: i32, %arg1: i32) -> (i32, i32) {
    %c0_i32 = arith.constant 0 : i32
    %c0_i32_0 = arith.constant 0 : i32
    %c0_i32_1 = arith.constant 0 : i32
    return %c0_i32, %c0_i32_0 : i32, i32
  }
  func.func @transform_4(%arg0: i32, %arg1: i32) -> (i32, i32) {
    %c0_i32 = arith.constant 0 : i32
    %c0_i32_0 = arith.constant 0 : i32
    %c0_i32_1 = arith.constant 0 : i32
    return %c0_i32, %c0_i32_0 : i32, i32
  }
  func.func @transform_5(%arg0: i32, %arg1: i32) -> (i32, i32) {
    %c0_i32 = arith.constant 0 : i32
    %c0_i32_0 = arith.constant 0 : i32
    %c0_i32_1 = arith.constant 0 : i32
    return %c0_i32, %c0_i32_0 : i32, i32
  }
  func.func @transform_6(%arg0: i32, %arg1: i32) -> (i32, i32, i32, i32) {
    %c0_i32 = arith.constant 0 : i32
    %c0_i32_0 = arith.constant 0 : i32
    %c0_i32_1 = arith.constant 0 : i32
    return %arg0, %c0_i32, %arg1, %c0_i32_0 : i32, i32, i32, i32
  }
}

module attributes {stable_mosaic.version = 11 : i64} {
  func.func @_last_layer_kernel(%arg0: i32, %arg1: i32, %arg2: memref<1x8x32xf32, #tpu.memory_space<vmem>>, %arg3: memref<1x8x32xf32, #tpu.memory_space<vmem>>, %arg4: memref<32x32xf32, #tpu.memory_space<vmem>>, %arg5: memref<1x32xf32, #tpu.memory_space<vmem>>, %arg6: memref<32x32xf32, #tpu.memory_space<vmem>>, %arg7: memref<1x32xf32, #tpu.memory_space<vmem>>, %arg8: memref<1x4x8x8xf32, #tpu.memory_space<vmem>>, %arg9: memref<8x32xf32, #tpu.memory_space<vmem>>) attributes {dimension_semantics = [#tpu.dimension_semantics<parallel>, #tpu.dimension_semantics<arbitrary>], iteration_bounds = array<i64: 2, 2>, scalar_prefetch = 0 : i64, scratch_operands = 1 : i64, tpu.core_type = #tpu.core_type<tc>, window_params = [{transform_indices = @transform_0, window_bounds = array<i64: 1, 8, 32>}, {transform_indices = @transform_1, window_bounds = array<i64: 1, 8, 32>}, {pipeline_mode = #tpu.pipeline_mode<synchronous>, transform_indices = @transform_2, window_bounds = array<i64: 32, 32>}, {pipeline_mode = #tpu.pipeline_mode<synchronous>, transform_indices = @transform_3, window_bounds = array<i64: 1, 32>}, {pipeline_mode = #tpu.pipeline_mode<synchronous>, transform_indices = @transform_4, window_bounds = array<i64: 32, 32>}, {pipeline_mode = #tpu.pipeline_mode<synchronous>, transform_indices = @transform_5, window_bounds = array<i64: 1, 32>}, {transform_indices = @transform_6, window_bounds = array<i64: 1, 4, 8, 8>}]} {
    %c0_i32 = arith.constant 0 : i32
    %0 = arith.cmpi eq, %arg1, %c0_i32 : i32
    %1 = arith.extui %0 : i1 to i32
    %c0_i32_0 = arith.constant 0 : i32
    %2 = arith.cmpi ne, %1, %c0_i32_0 : i32
    scf.if %2 {
      %c0_26 = arith.constant 0 : index
      %c0_27 = arith.constant 0 : index
      %c0_28 = arith.constant 0 : index
      %35 = vector.load %arg3[%c0_26, %c0_27, %c0_28] : memref<1x8x32xf32, #tpu.memory_space<vmem>>, vector<1x8x32xf32>
      %36 = vector.shape_cast %35 : vector<1x8x32xf32> to vector<8x32xf32>
      %c0_29 = arith.constant 0 : index
      %c0_30 = arith.constant 0 : index
      %37 = vector.load %arg6[%c0_29, %c0_30] : memref<32x32xf32, #tpu.memory_space<vmem>>, vector<32x32xf32>
      %cst_31 = arith.constant dense<0.000000e+00> : vector<8x32xf32>
      %38 = tpu.matmul %36, %37, %cst_31 {dimension_numbers = #tpu.dot_dimension_numbers<[1], [0], [0], [1], [0, 0, 1, 1], [], []>} : vector<8x32xf32>, vector<32x32xf32>, vector<8x32xf32> -> vector<8x32xf32>
      %c0_32 = arith.constant 0 : index
      %c0_33 = arith.constant 0 : index
      %39 = vector.load %arg7[%c0_32, %c0_33] : memref<1x32xf32, #tpu.memory_space<vmem>>, vector<1x32xf32>
      %40 = vector.broadcast %39 : vector<1x32xf32> to vector<8x32xf32>
      %41 = arith.addf %38, %40 : vector<8x32xf32>
      %c0_34 = arith.constant 0 : index
      %c0_35 = arith.constant 0 : index
      %42 = vector.load %arg9[%c0_34, %c0_35] : memref<8x32xf32, #tpu.memory_space<vmem>>, vector<8x32xf32>
      tpu.vector_store %arg9[%c0_34, %c0_35], %41 {strides = array<i32>} : memref<8x32xf32, #tpu.memory_space<vmem>>, vector<8x32xf32>,
    } else {
    }
    %c0 = arith.constant 0 : index
    %c0_1 = arith.constant 0 : index
    %c0_2 = arith.constant 0 : index
    %3 = vector.load %arg2[%c0, %c0_1, %c0_2] : memref<1x8x32xf32, #tpu.memory_space<vmem>>, vector<1x8x32xf32>
    %4 = vector.shape_cast %3 : vector<1x8x32xf32> to vector<8x32xf32>
    %c0_3 = arith.constant 0 : index
    %c0_4 = arith.constant 0 : index
    %5 = vector.load %arg4[%c0_3, %c0_4] : memref<32x32xf32, #tpu.memory_space<vmem>>, vector<32x32xf32>
    %cst = arith.constant dense<0.000000e+00> : vector<8x32xf32>
    %6 = tpu.matmul %4, %5, %cst {dimension_numbers = #tpu.dot_dimension_numbers<[1], [0], [0], [1], [0, 0, 1, 1], [], []>} : vector<8x32xf32>, vector<32x32xf32>, vector<8x32xf32> -> vector<8x32xf32>
    %c0_5 = arith.constant 0 : index
    %c0_6 = arith.constant 0 : index
    %7 = vector.load %arg5[%c0_5, %c0_6] : memref<1x32xf32, #tpu.memory_space<vmem>>, vector<1x32xf32>
    %8 = vector.broadcast %7 : vector<1x32xf32> to vector<8x32xf32>
    %9 = arith.addf %6, %8 : vector<8x32xf32>
    %c0_7 = arith.constant 0 : index
    %c0_8 = arith.constant 0 : index
    %10 = vector.load %arg9[%c0_7, %c0_8] : memref<8x32xf32, #tpu.memory_space<vmem>>, vector<8x32xf32>
    %11 = vector.extract_strided_slice %9 {offsets = [0, 0], sizes = [8, 8], strides = [1, 1]} : vector<8x32xf32> to vector<8x8xf32>
    %12 = vector.extract_strided_slice %10 {offsets = [0, 0], sizes = [8, 8], strides = [1, 1]} : vector<8x32xf32> to vector<8x8xf32>
    %cst_9 = arith.constant dense<0.000000e+00> : vector<8x8xf32>
    %13 = tpu.matmul %11, %12, %cst_9 {dimension_numbers = #tpu.dot_dimension_numbers<[1], [1], [0], [0], [0, 0, 1, 0], [], []>} : vector<8x8xf32>, vector<8x8xf32>, vector<8x8xf32> -> vector<8x8xf32>
    %c0_10 = arith.constant 0 : index
    %c0_11 = arith.constant 0 : index
    %c0_12 = arith.constant 0 : index
    %c0_13 = arith.constant 0 : index
    %14 = vector.load %arg8[%c0_10, %c0_11, %c0_12, %c0_13] : memref<1x4x8x8xf32, #tpu.memory_space<vmem>>, vector<1x1x8x8xf32>
    %15 = vector.shape_cast %14 : vector<1x1x8x8xf32> to vector<8x8xf32>
    %16 = vector.shape_cast %13 : vector<8x8xf32> to vector<1x1x8x8xf32>
    tpu.vector_store %arg8[%c0_10, %c0_11, %c0_12, %c0_13], %16 {strides = array<i32>} : memref<1x4x8x8xf32, #tpu.memory_space<vmem>>, vector<1x1x8x8xf32>,
    %17 = vector.extract_strided_slice %9 {offsets = [0, 8], sizes = [8, 8], strides = [1, 1]} : vector<8x32xf32> to vector<8x8xf32>
    %18 = vector.extract_strided_slice %10 {offsets = [0, 8], sizes = [8, 8], strides = [1, 1]} : vector<8x32xf32> to vector<8x8xf32>
    %cst_14 = arith.constant dense<0.000000e+00> : vector<8x8xf32>
    %19 = tpu.matmul %17, %18, %cst_14 {dimension_numbers = #tpu.dot_dimension_numbers<[1], [1], [0], [0], [0, 0, 1, 0], [], []>} : vector<8x8xf32>, vector<8x8xf32>, vector<8x8xf32> -> vector<8x8xf32>
    %c0_15 = arith.constant 0 : index
    %c1 = arith.constant 1 : index
    %c0_16 = arith.constant 0 : index
    %c0_17 = arith.constant 0 : index
    %20 = vector.load %arg8[%c0_15, %c1, %c0_16, %c0_17] : memref<1x4x8x8xf32, #tpu.memory_space<vmem>>, vector<1x1x8x8xf32>
    %21 = vector.shape_cast %20 : vector<1x1x8x8xf32> to vector<8x8xf32>
    %22 = vector.shape_cast %19 : vector<8x8xf32> to vector<1x1x8x8xf32>
    tpu.vector_store %arg8[%c0_15, %c1, %c0_16, %c0_17], %22 {strides = array<i32>} : memref<1x4x8x8xf32, #tpu.memory_space<vmem>>, vector<1x1x8x8xf32>,
    %23 = vector.extract_strided_slice %9 {offsets = [0, 16], sizes = [8, 8], strides = [1, 1]} : vector<8x32xf32> to vector<8x8xf32>
    %24 = vector.extract_strided_slice %10 {offsets = [0, 16], sizes = [8, 8], strides = [1, 1]} : vector<8x32xf32> to vector<8x8xf32>
    %cst_18 = arith.constant dense<0.000000e+00> : vector<8x8xf32>
    %25 = tpu.matmul %23, %24, %cst_18 {dimension_numbers = #tpu.dot_dimension_numbers<[1], [1], [0], [0], [0, 0, 1, 0], [], []>} : vector<8x8xf32>, vector<8x8xf32>, vector<8x8xf32> -> vector<8x8xf32>
    %c0_19 = arith.constant 0 : index
    %c2 = arith.constant 2 : index
    %c0_20 = arith.constant 0 : index
    %c0_21 = arith.constant 0 : index
    %26 = vector.load %arg8[%c0_19, %c2, %c0_20, %c0_21] : memref<1x4x8x8xf32, #tpu.memory_space<vmem>>, vector<1x1x8x8xf32>
    %27 = vector.shape_cast %26 : vector<1x1x8x8xf32> to vector<8x8xf32>
    %28 = vector.shape_cast %25 : vector<8x8xf32> to vector<1x1x8x8xf32>
    tpu.vector_store %arg8[%c0_19, %c2, %c0_20, %c0_21], %28 {strides = array<i32>} : memref<1x4x8x8xf32, #tpu.memory_space<vmem>>, vector<1x1x8x8xf32>,
    %29 = vector.extract_strided_slice %9 {offsets = [0, 24], sizes = [8, 8], strides = [1, 1]} : vector<8x32xf32> to vector<8x8xf32>
    %30 = vector.extract_strided_slice %10 {offsets = [0, 24], sizes = [8, 8], strides = [1, 1]} : vector<8x32xf32> to vector<8x8xf32>
    %cst_22 = arith.constant dense<0.000000e+00> : vector<8x8xf32>
    %31 = tpu.matmul %29, %30, %cst_22 {dimension_numbers = #tpu.dot_dimension_numbers<[1], [1], [0], [0], [0, 0, 1, 0], [], []>} : vector<8x8xf32>, vector<8x8xf32>, vector<8x8xf32> -> vector<8x8xf32>
    %c0_23 = arith.constant 0 : index
    %c3 = arith.constant 3 : index
    %c0_24 = arith.constant 0 : index
    %c0_25 = arith.constant 0 : index
    %32 = vector.load %arg8[%c0_23, %c3, %c0_24, %c0_25] : memref<1x4x8x8xf32, #tpu.memory_space<vmem>>, vector<1x1x8x8xf32>
    %33 = vector.shape_cast %32 : vector<1x1x8x8xf32> to vector<8x8xf32>
    %34 = vector.shape_cast %31 : vector<8x8xf32> to vector<1x1x8x8xf32>
    tpu.vector_store %arg8[%c0_23, %c3, %c0_24, %c0_25], %34 {strides = array<i32>} : memref<1x4x8x8xf32, #tpu.memory_space<vmem>>, vector<1x1x8x8xf32>,
    return
  }
  func.func @transform_0(%arg0: i32, %arg1: i32) -> (i32, i32, i32) {
    %c0_i32 = arith.constant 0 : i32
    %c0_i32_0 = arith.constant 0 : i32
    return %arg0, %arg1, %c0_i32 : i32, i32, i32
  }
  func.func @transform_1(%arg0: i32, %arg1: i32) -> (i32, i32, i32) {
    %c0_i32 = arith.constant 0 : i32
    %c0_i32_0 = arith.constant 0 : i32
    %c0_i32_1 = arith.constant 0 : i32
    return %arg0, %c0_i32, %c0_i32_0 : i32, i32, i32
  }
  func.func @transform_2(%arg0: i32, %arg1: i32) -> (i32, i32) {
    %c0_i32 = arith.constant 0 : i32
    %c0_i32_0 = arith.constant 0 : i32
    %c0_i32_1 = arith.constant 0 : i32
    return %c0_i32, %c0_i32_0 : i32, i32
  }
  func.func @transform_3(%arg0: i32, %arg1: i32) -> (i32, i32) {
    %c0_i32 = arith.constant 0 : i32
    %c0_i32_0 = arith.constant 0 : i32
    %c0_i32_1 = arith.constant 0 : i32
    return %c0_i32, %c0_i32_0 : i32, i32
  }
  func.func @transform_4(%arg0: i32, %arg1: i32) -> (i32, i32) {
    %c0_i32 = arith.constant 0 : i32
    %c0_i32_0 = arith.constant 0 : i32
    %c0_i32_1 = arith.constant 0 : i32
    return %c0_i32, %c0_i32_0 : i32, i32
  }
  func.func @transform_5(%arg0: i32, %arg1: i32) -> (i32, i32) {
    %c0_i32 = arith.constant 0 : i32
    %c0_i32_0 = arith.constant 0 : i32
    %c0_i32_1 = arith.constant 0 : i32
    return %c0_i32, %c0_i32_0 : i32, i32
  }
  func.func @transform_6(%arg0: i32, %arg1: i32) -> (i32, i32, i32, i32) {
    %c0_i32 = arith.constant 0 : i32
    %c0_i32_0 = arith.constant 0 : i32
    %c0_i32_1 = arith.constant 0 : i32
    return %arg0, %c0_i32, %arg1, %c0_i32_0 : i32, i32, i32, i32
  }
}

</mosaic_0001>

<llo_original>
// kernel: tpu_custom_call.1
$region0: #{tpu_custom_call.1}
  #allocation0 [shape = 'u32[]', space=smem, size = 0x4, offset = 0x4, fixed_abs, tag = 'smem constant byte address 0x4 - core index']
  #allocation1 [shape = 'u32[144,128]{1,0:T(1,128)}', space=vmem, size = 0x12000, scoped, tag = 'internal scratch']
  #allocation2 [shape = 'f32[8,32]{1,0:T(8,128)}', space=vmem, size = 0x1000, scoped, tag = 'scratch operand']
  %s0 = inlined_call_operand.hbm [shape: f32[2,16,32], index: 0, kind: input, shape index: {}]
  %s1 = inlined_call_operand.hbm [shape: f32[2,8,32], index: 1, kind: input, shape index: {}]
  %s2 = inlined_call_operand.hbm [shape: f32[32,32], index: 2, kind: input, shape index: {}]
  %s3 = inlined_call_operand.vmem [shape: f32[1,32], index: 3, kind: input, shape index: {}]
  %s4 = inlined_call_operand.hbm [shape: f32[32,32], index: 4, kind: input, shape index: {}]
  %s5 = inlined_call_operand.vmem [shape: f32[1,32], index: 5, kind: input, shape index: {}]
  %s6 = inlined_call_operand.vmem [shape: f32[2,4,16,8], index: 6, kind: output, shape index: {}]
  %s7 = sld [smem:[#allocation0]]
  $region111: #{tpu_custom_call.1} parent=0
    _
  %s9 = ssub.s32 1, %s7
  %s10 = scalar_select 0, %s9, %s7
  $region1: #{tpu_custom_call.1} parent=0
    #allocation3 [shape = 'u8[8192]{0}', space=vmem, size = 0x2000, scoped, tag = 'input window, operand 0']
    #allocation4 [shape = 's32[2]{0}', space=sflag, size = 0x8, scoped, tag = 'scoped memory for tpu_custom_call.1']
    #allocation5 [shape = 'u8[8192]{0}', space=vmem, size = 0x2000, scoped, tag = 'input window, operand 1']
    #allocation6 [shape = 's32[2]{0}', space=sflag, size = 0x8, scoped, tag = 'scoped memory for tpu_custom_call.1']
    #allocation7 [shape = 'u8[16384]{0}', space=vmem, size = 0x4000, scoped, tag = 'input window, operand 2, single buffered']
    #allocation8 [shape = 'u8[16384]{0}', space=vmem, size = 0x4000, scoped, tag = 'input window, operand 4, single buffered']
    #allocation9 [shape = 's32[1]{0}', space=sflag, size = 0x4, scoped, tag = 'scoped memory for tpu_custom_call.1']
    #allocation10 [shape = 'u8[32768]{0}', space=vmem, size = 0x8000, scoped, tag = 'output window, operand 0']
    %11 = vsyncpa [#allocation4], 0
    %s12 = scalar_lea.sflag [#allocation4], 1
    %13 = vsyncpa %s12, 0
    %14 = vsyncpa [#allocation6], 0
    %s15 = scalar_lea.sflag [#allocation6], 1
    %16 = vsyncpa %s15, 0
    %17 = vsyncpa [#allocation9], 0
    loop: start=0, step=1, limit=6
    $region2: #{tpu_custom_call.1} parent=1 // loop_pre_header
      _
    $region3: #{tpu_custom_call.1} parent=1 // loop_header
      %s19 = sphi 0, %s23
      %p20 = scmp.ge.s32.totalorder %s19, 6
      %s26 = sphi 0, %s38
      %s27 = sphi 0, %s34
      %s28 = sphi 0, %s26
      %s29 = sphi 0, %s27
      %s30 = sphi 0, %s28
      %s31 = sphi 0, %s29
      %s43 = sphi 0, %s45
      %s46 = sphi 0, %s43
      %s47 = sphi 0, %s46
      %s63 = sphi 0, %s47
      %s69 = sphi 0, %s71
      %s72 = sphi 0, %s69
      %s73 = sphi 0, %s72
      %s89 = sphi 0, %s73
      %s93 = sphi 0, %s93
      %s95 = sphi 0, %s93
      %s96 = sphi 0, %s95
      %s110 = sphi 0, %s96
      %s114 = sphi 0, %s114
      %s116 = sphi 0, %s114
      %s117 = sphi 0, %s116
      %s131 = sphi 0, %s117
      %s135 = sphi 0, %s135
      %s137 = sphi 0, %s135
      %s138 = sphi 0, %s137
      %s152 = sphi 0, %s138
      %s156 = sphi 0, %s156
      %s158 = sphi 0, %s156
      %s159 = sphi 0, %s158
      %s173 = sphi 0, %s159
      %s181 = sphi 0, %s183
      %s184 = sphi 0, %s181
      %s185 = sphi 0, %s184
      %s201 = sphi 0, %s185
    $region4: #{tpu_custom_call.1} parent=1 // loop_header_branch
      %22 = sbr.rel (%p20) target = $region8
    $region5: #{tpu_custom_call.1} parent=1 // loop_body
      %s24 = ssub.s32 %s19, 1
      %s25 = ssub.s32 %s19, 2
      %s32 = sadd.s32 1, %s27
      %p33 = scmp.ge.s32.totalorder %s32, 2
      %s34 = scalar_select %p33, 0, %s32
      %s35 = sadd.s32 1, %s26
      %s36 = scalar_select %p33, %s35, %s26
      %p37 = scmp.ge.s32.totalorder %s36, 2
      %s38 = scalar_select %p37, 0, %s36
      %s39 = ssub.s32 %s26, %s38
      %s40 = ssub.s32 %s27, %s34
      %s41 = sor.u32 %s39, %s40
      %p42 = scmp.eq.s32.totalorder %s41, 0
      %s44 = sadd.s32 %s43, 1
      %s45 = scalar_select %p42, %s43, %s44
      %p48 = pneg %p42
      %p49 = scmp.eq.s32.totalorder %s19, 3
      %p50 = por %p48, %p49
      %p51 = scmp.ne.s32.totalorder %s43, %s46
      %p52 = scmp.eq.s32.totalorder %s19, 0
      %p53 = por %p51, %p52
      %p54 = scmp.ne.s32.totalorder %s43, %s46
      %p55 = scmp.eq.s32.totalorder %s24, 3
      %p56 = por %p54, %p55
      %p57 = scmp.ne.s32.totalorder %s46, %s47
      %p58 = scmp.eq.s32.totalorder %s24, 0
      %p59 = por %p57, %p58
      %p60 = scmp.ne.s32.totalorder %s46, %s47
      %p61 = scmp.eq.s32.totalorder %s25, 3
      %p62 = por %p60, %p61
      %p64 = scmp.ne.s32.totalorder %s47, %s63
      %p65 = scmp.eq.s32.totalorder %s25, 0
      %p66 = por %p64, %p65
      %s67 = ssub.s32 %s26, %s38
      %p68 = scmp.eq.s32.totalorder %s67, 0
      %s70 = sadd.s32 %s69, 1
      %s71 = scalar_select %p68, %s69, %s70
      %p74 = pneg %p68
      %p75 = scmp.eq.s32.totalorder %s19, 3
      %p76 = por %p74, %p75
      %p77 = scmp.ne.s32.totalorder %s69, %s72
      %p78 = scmp.eq.s32.totalorder %s19, 0
      %p79 = por %p77, %p78
      %p80 = scmp.ne.s32.totalorder %s69, %s72
      %p81 = scmp.eq.s32.totalorder %s24, 3
      %p82 = por %p80, %p81
      %p83 = scmp.ne.s32.totalorder %s72, %s73
      %p84 = scmp.eq.s32.totalorder %s24, 0
      %p85 = por %p83, %p84
      %p86 = scmp.ne.s32.totalorder %s72, %s73
      %p87 = scmp.eq.s32.totalorder %s25, 3
      %p88 = por %p86, %p87
      %p90 = scmp.ne.s32.totalorder %s73, %s89
      %p91 = scmp.eq.s32.totalorder %s25, 0
      %p92 = por %p90, %p91
      %s94 = sadd.s32 %s93, 1
      %p97 = scmp.eq.s32.totalorder %s19, 3
      %p98 = scmp.ne.s32.totalorder %s93, %s95
      %p99 = scmp.eq.s32.totalorder %s19, 0
      %p100 = por %p98, %p99
      %p101 = scmp.ne.s32.totalorder %s93, %s95
      %p102 = scmp.eq.s32.totalorder %s24, 3
      %p103 = por %p101, %p102
      %p104 = scmp.ne.s32.totalorder %s95, %s96
      %p105 = scmp.eq.s32.totalorder %s24, 0
      %p106 = por %p104, %p105
      %p107 = scmp.ne.s32.totalorder %s95, %s96
      %p108 = scmp.eq.s32.totalorder %s25, 3
      %p109 = por %p107, %p108
      %p111 = scmp.ne.s32.totalorder %s96, %s110
      %p112 = scmp.eq.s32.totalorder %s25, 0
      %p113 = por %p111, %p112
      %s115 = sadd.s32 %s114, 1
      %p118 = scmp.eq.s32.totalorder %s19, 3
      %p119 = scmp.ne.s32.totalorder %s114, %s116
      %p120 = scmp.eq.s32.totalorder %s19, 0
      %p121 = por %p119, %p120
      %p122 = scmp.ne.s32.totalorder %s114, %s116
      %p123 = scmp.eq.s32.totalorder %s24, 3
      %p124 = por %p122, %p123
      %p125 = scmp.ne.s32.totalorder %s116, %s117
      %p126 = scmp.eq.s32.totalorder %s24, 0
      %p127 = por %p125, %p126
      %p128 = scmp.ne.s32.totalorder %s116, %s117
      %p129 = scmp.eq.s32.totalorder %s25, 3
      %p130 = por %p128, %p129
      %p132 = scmp.ne.s32.totalorder %s117, %s131
      %p133 = scmp.eq.s32.totalorder %s25, 0
      %p134 = por %p132, %p133
      %s136 = sadd.s32 %s135, 1
      %p139 = scmp.eq.s32.totalorder %s19, 3
      %p140 = scmp.ne.s32.totalorder %s135, %s137
      %p141 = scmp.eq.s32.totalorder %s19, 0
      %p142 = por %p140, %p141
      %p143 = scmp.ne.s32.totalorder %s135, %s137
      %p144 = scmp.eq.s32.totalorder %s24, 3
      %p145 = por %p143, %p144
      %p146 = scmp.ne.s32.totalorder %s137, %s138
      %p147 = scmp.eq.s32.totalorder %s24, 0
      %p148 = por %p146, %p147
      %p149 = scmp.ne.s32.totalorder %s137, %s138
      %p150 = scmp.eq.s32.totalorder %s25, 3
      %p151 = por %p149, %p150
      %p153 = scmp.ne.s32.totalorder %s138, %s152
      %p154 = scmp.eq.s32.totalorder %s25, 0
      %p155 = por %p153, %p154
      %s157 = sadd.s32 %s156, 1
      %p160 = scmp.eq.s32.totalorder %s19, 3
      %p161 = scmp.ne.s32.totalorder %s156, %s158
      %p162 = scmp.eq.s32.totalorder %s19, 0
      %p163 = por %p161, %p162
      %p164 = scmp.ne.s32.totalorder %s156, %s158
      %p165 = scmp.eq.s32.totalorder %s24, 3
      %p166 = por %p164, %p165
      %p167 = scmp.ne.s32.totalorder %s158, %s159
      %p168 = scmp.eq.s32.totalorder %s24, 0
      %p169 = por %p167, %p168
      %p170 = scmp.ne.s32.totalorder %s158, %s159
      %p171 = scmp.eq.s32.totalorder %s25, 3
      %p172 = por %p170, %p171
      %p174 = scmp.ne.s32.totalorder %s159, %s173
      %p175 = scmp.eq.s32.totalorder %s25, 0
      %p176 = por %p174, %p175
      %s177 = ssub.s32 %s26, %s38
      %s178 = ssub.s32 %s27, %s34
      %s179 = sor.u32 %s177, %s178
      %p180 = scmp.eq.s32.totalorder %s179, 0
      %s182 = sadd.s32 %s181, 1
      %s183 = scalar_select %p180, %s181, %s182
      %p186 = pneg %p180
      %p187 = scmp.eq.s32.totalorder %s19, 3
      %p188 = por %p186, %p187
      %p189 = scmp.ne.s32.totalorder %s181, %s184
      %p190 = scmp.eq.s32.totalorder %s19, 0
      %p191 = por %p189, %p190
      %p192 = scmp.ne.s32.totalorder %s181, %s184
      %p193 = scmp.eq.s32.totalorder %s24, 3
      %p194 = por %p192, %p193
      %p195 = scmp.ne.s32.totalorder %s184, %s185
      %p196 = scmp.eq.s32.totalorder %s24, 0
      %p197 = por %p195, %p196
      %p198 = scmp.ne.s32.totalorder %s184, %s185
      %p199 = scmp.eq.s32.totalorder %s25, 3
      %p200 = por %p198, %p199
      %p202 = scmp.ne.s32.totalorder %s185, %s201
      %p203 = scmp.eq.s32.totalorder %s25, 0
      %p204 = por %p202, %p203
      %p205 = scmp.le.s32.totalorder 1, %s19
      %p206 = scmp.lt.s32.totalorder %s19, 5
      %p207 = pnand %p205, %p206
      %p208 = pneg %p207
      // Predicated region
      $region9: #{tpu_custom_call.1} parent=5 // pred_check
        _
      $region10: #{tpu_custom_call.1} parent=5 // pred_check_branch
        %210 = sbr.rel (%p207) target = $region12
      $region11: #{tpu_custom_call.1} parent=5 // pred_region
        %s211 = ssub.s32 %s19, 1
        // Predicated region
        $region13: #{tpu_custom_call.1} parent=11 // pred_check
          %p212 = pneg %p106
        $region14: #{tpu_custom_call.1} parent=11 // pred_check_branch
          %214 = sbr.rel (%p212) target = $region16
        $region15: #{tpu_custom_call.1} parent=11 // pred_region
          %s216 = ssub.s32 512, 512
          %217 = vsyncadd [#allocation6], %s216
          %s218 = sshll.u32 [#allocation7], 4
          %s219 = int_to_ptr.vmem [resolvable:$true] %s218
          %224 = dma.hbm_to_vmem [thread:$0]  %s2, 512, %s219, [#allocation6], 128, 128, 8
        $region16: #{tpu_custom_call.1} parent=11 // pred_fallthru
          _
        // Predicated region
        $region17: #{tpu_custom_call.1} parent=11 // pred_check
          %p225 = pneg %p127
        $region18: #{tpu_custom_call.1} parent=11 // pred_check_branch
          %227 = sbr.rel (%p225) target = $region20
        $region19: #{tpu_custom_call.1} parent=11 // pred_region
          _
        $region20: #{tpu_custom_call.1} parent=11 // pred_fallthru
          _
        // Predicated region
        $region21: #{tpu_custom_call.1} parent=11 // pred_check
          %p228 = pneg %p148
        $region22: #{tpu_custom_call.1} parent=11 // pred_check_branch
          %230 = sbr.rel (%p228) target = $region24
        $region23: #{tpu_custom_call.1} parent=11 // pred_region
          %s232 = ssub.s32 512, 512
          %233 = vsyncadd [#allocation9], %s232
          %s234 = sshll.u32 [#allocation8], 4
          %s235 = int_to_ptr.vmem [resolvable:$true] %s234
          %240 = dma.hbm_to_vmem [thread:$0]  %s4, 512, %s235, [#allocation9], 128, 128, 8
        $region24: #{tpu_custom_call.1} parent=11 // pred_fallthru
          _
        // Predicated region
        $region25: #{tpu_custom_call.1} parent=11 // pred_check
          %p241 = pneg %p169
        $region26: #{tpu_custom_call.1} parent=11 // pred_check_branch
          %243 = sbr.rel (%p241) target = $region28
        $region27: #{tpu_custom_call.1} parent=11 // pred_region
          _
        $region28: #{tpu_custom_call.1} parent=11 // pred_fallthru
          _
      $region12: #{tpu_custom_call.1} parent=5 // pred_fallthru
        _
      %p244 = scmp.lt.s32.totalorder %s19, 4
      // Predicated region
      $region29: #{tpu_custom_call.1} parent=5 // pred_check
        %p245 = pneg %p244
      $region30: #{tpu_custom_call.1} parent=5 // pred_check_branch
        %247 = sbr.rel (%p245) target = $region32
      $region31: #{tpu_custom_call.1} parent=5 // pred_region
        // Predicated region
        $region33: #{tpu_custom_call.1} parent=31 // pred_check
          %p248 = pneg %p53
        $region34: #{tpu_custom_call.1} parent=31 // pred_check_branch
          %250 = sbr.rel (%p248) target = $region36
        $region35: #{tpu_custom_call.1} parent=31 // pred_region
          %s251 = sand.u32 %s43, 1
          %s252 = scalar_lea.sflag [#allocation4], %s251
          %s253 = sand.u32 %s43, 1
          %s254 = smul.addr %s253, 8
          %s255 = scalar_lea.vmem [#allocation3], %s254
          %s257 = ssub.s32 128, 128
          %258 = vsyncadd %s252, %s257
          %s259 = smul.addr %s26, 2
          %s260 = sadd.s32 %s27, %s259
          %s261 = smul.addr %s260, 128
          %s262 = scalar_lea.hbm %s0, %s261
          %s264 = sshll.u32 %s255, 4
          %s265 = int_to_ptr.vmem [resolvable:$true] %s264
          %267 = dma.hbm_to_vmem [thread:$0]  %s262, 128, %s265, %s252
        $region36: #{tpu_custom_call.1} parent=31 // pred_fallthru
          _
        // Predicated region
        $region37: #{tpu_custom_call.1} parent=31 // pred_check
          %p268 = pneg %p79
        $region38: #{tpu_custom_call.1} parent=31 // pred_check_branch
          %270 = sbr.rel (%p268) target = $region40
        $region39: #{tpu_custom_call.1} parent=31 // pred_region
          %s271 = sand.u32 %s19, 1
          %s272 = scalar_lea.sflag [#allocation6], %s271
          %s273 = sand.u32 %s69, 1
          %s274 = smul.addr %s273, 8
          %s275 = scalar_lea.vmem [#allocation5], %s274
          %s277 = ssub.s32 128, 128
          %278 = vsyncadd %s272, %s277
          %s279 = smul.addr %s26, 128
          %s280 = scalar_lea.hbm %s1, %s279
          %s282 = sshll.u32 %s275, 4
          %s283 = int_to_ptr.vmem [resolvable:$true] %s282
          %285 = dma.hbm_to_vmem [thread:$0]  %s280, 128, %s283, %s272
        $region40: #{tpu_custom_call.1} parent=31 // pred_fallthru
          _
      $region32: #{tpu_custom_call.1} parent=5 // pred_fallthru
        _
      %p286 = scmp.le.s32.totalorder 1, %s19
      %p287 = scmp.lt.s32.totalorder %s19, 5
      %p288 = pnand %p286, %p287
      %p289 = pneg %p288
      // Predicated region
      $region41: #{tpu_custom_call.1} parent=5 // pred_check
        _
      $region42: #{tpu_custom_call.1} parent=5 // pred_check_branch
        %291 = sbr.rel (%p288) target = $region44
      $region43: #{tpu_custom_call.1} parent=5 // pred_region
        %s292 = ssub.s32 %s19, 1
        %s293 = sand.u32 %s46, 1
        %s294 = scalar_lea.sflag [#allocation4], %s293
        %s295 = sand.u32 %s46, 1
        %s296 = smul.addr %s295, 8
        %s297 = scalar_lea.vmem [#allocation3], %s296
        // Predicated region
        $region45: #{tpu_custom_call.1} parent=43 // pred_check
          %p298 = pneg %p59
        $region46: #{tpu_custom_call.1} parent=43 // pred_check_branch
          %300 = sbr.rel (%p298) target = $region48
        $region47: #{tpu_custom_call.1} parent=43 // pred_region
          %301 = dma.done %s294, 128
        $region48: #{tpu_custom_call.1} parent=43 // pred_fallthru
          _
        %s302 = sand.u32 %s24, 1
        %s303 = scalar_lea.sflag [#allocation6], %s302
        %s304 = sand.u32 %s72, 1
        %s305 = smul.addr %s304, 8
        %s306 = scalar_lea.vmem [#allocation5], %s305
        // Predicated region
        $region49: #{tpu_custom_call.1} parent=43 // pred_check
          %p307 = pneg %p85
        $region50: #{tpu_custom_call.1} parent=43 // pred_check_branch
          %309 = sbr.rel (%p307) target = $region52
        $region51: #{tpu_custom_call.1} parent=43 // pred_region
          %310 = dma.done %s303, 128
        $region52: #{tpu_custom_call.1} parent=43 // pred_fallthru
          _
        // Predicated region
        $region53: #{tpu_custom_call.1} parent=43 // pred_check
          %p311 = pneg %p106
        $region54: #{tpu_custom_call.1} parent=43 // pred_check_branch
          %313 = sbr.rel (%p311) target = $region56
        $region55: #{tpu_custom_call.1} parent=43 // pred_region
          %314 = dma.done [#allocation6], 512
        $region56: #{tpu_custom_call.1} parent=43 // pred_fallthru
          _
        // Predicated region
        $region57: #{tpu_custom_call.1} parent=43 // pred_check
          %p315 = pneg %p148
        $region58: #{tpu_custom_call.1} parent=43 // pred_check_branch
          %317 = sbr.rel (%p315) target = $region60
        $region59: #{tpu_custom_call.1} parent=43 // pred_region
          %318 = dma.done [#allocation9], 512
        $region60: #{tpu_custom_call.1} parent=43 // pred_fallthru
          _
        %s319 = sand.u32 %s46, 1
        %s320 = scalar_lea.sflag [#allocation4], %s319
        %s321 = sand.u32 %s46, 1
        %s322 = smul.addr %s321, 8
        %s323 = scalar_lea.vmem [#allocation3], %s322
        %p324 = pneg %p59
        %p325 = pneg %p56
        %s326 = sand.u32 %s24, 1
        %s327 = scalar_lea.sflag [#allocation6], %s326
        %s328 = sand.u32 %s72, 1
        %s329 = smul.addr %s328, 8
        %s330 = scalar_lea.vmem [#allocation5], %s329
        %p331 = pneg %p85
        %p332 = pneg %p82
        %p333 = pneg %p106
        %p334 = pneg %p103
        %p335 = pneg %p127
        %p336 = pneg %p124
        %p337 = pneg %p148
        %p338 = pneg %p145
        %p339 = pneg %p169
        %p340 = pneg %p166
        %p341 = pneg %p197
        %p342 = pneg %p194
        %s343 = sand.u32 %s184, 1
        %s344 = sand.u32 %s184, 1
        %s345 = smul.addr %s344, 32
        %s346 = scalar_lea.vmem [#allocation10], %s345
        %p347 = scmp.eq.s32.totalorder %s29, 0
        // Predicated region
        $region61: #{tpu_custom_call.1} parent=43 // pred_check
          %p348 = pneg %p347
        $region62: #{tpu_custom_call.1} parent=43 // pred_check_branch
          %350 = sbr.rel (%p348) target = $region64
        $region63: #{tpu_custom_call.1} parent=43 // pred_region
          %v351 = vld [vmem:[%s306] sm:$0xff]
          %v352 = vld [vmem:[#allocation8] sm:$0xff]
          %v353 = vld [vmem:[#allocation8 + $0x8] sm:$0xff]
          %v354 = vld [vmem:[#allocation8 + $0x10] sm:$0xff]
          %v355 = vld [vmem:[#allocation8 + $0x18] sm:$0xff]
          %v356 = vld [vmem:[%s5] sm:$0x1]
          %v358 = vlaneseq
          %v359 = vshrl.u32 %v358, 7
          %v360 = vsub.s32 0, %v359
          %v361 = vrot.slane %v356, %v360
          %vm363 = vcmask 261120
          %v365 = vsel %vm363, %v351, 0
          %367 = vmatprep.subr.mxu0 0.0
          %368 = vmatpush1.msra.mxu0 0.0
          %369 = vmatprep.subr.mxu0 0.0
          %370 = vmatpush1.msra.mxu0 0.0
          %371 = vmatprep.subr.mxu0 0.0
          %372 = vmatpush1.msra.mxu0 0.0
          %373 = vmatprep.subr.mxu0 0.0
          %374 = vmatpush1.msra.mxu0 0.0
          %375 = vmatprep.subr.mxu0 0.0
          %376 = vmatpush1.msra.mxu0 0.0
          %377 = vmatprep.subr.mxu0 0.0
          %378 = vmatpush1.msra.mxu0 0.0
          %379 = vmatprep.subr.mxu0 0.0
          %380 = vmatpush1.msra.mxu0 0.0
          %381 = vmatprep.subr.mxu0 0.0
          %382 = vmatpush1.msra.mxu0 0.0
          %383 = vmatprep.subr.mxu0 0.0
          %384 = vmatpush1.msra.mxu0 0.0
          %385 = vmatprep.subr.mxu0 0.0
          %386 = vmatpush1.msra.mxu0 0.0
          %387 = vmatprep.subr.mxu0 0.0
          %388 = vmatpush1.msra.mxu0 0.0
          %389 = vmatprep.subr.mxu0 0.0
          %390 = vmatpush1.msra.mxu0 0.0
          %391 = vmatprep.subr.mxu0 0.0
          %392 = vmatpush1.msra.mxu0 %v355
          %393 = vmatprep.subr.mxu0 0.0
          %394 = vmatpush1.msra.mxu0 %v354
          %395 = vmatprep.subr.mxu0 0.0
          %396 = vmatpush1.msra.mxu0 %v353
          %397 = vmatprep.subr.mxu0 0.0
          %398 = vmatpush1.msra.mxu0 %v352
          %399 = vmatprep.subr.mxu0 0.0
          %400 = vmatpush2.msra.mxu0 0.0
          %401 = vmatprep.subr.mxu0 0.0
          %402 = vmatpush2.msra.mxu0 0.0
          %403 = vmatprep.subr.mxu0 0.0
          %404 = vmatpush2.msra.mxu0 0.0
          %405 = vmatprep.subr.mxu0 0.0
          %406 = vmatpush2.msra.mxu0 0.0
          %407 = vmatprep.subr.mxu0 0.0
          %408 = vmatpush2.msra.mxu0 0.0
          %409 = vmatprep.subr.mxu0 0.0
          %410 = vmatpush2.msra.mxu0 0.0
          %411 = vmatprep.subr.mxu0 0.0
          %412 = vmatpush2.msra.mxu0 0.0
          %413 = vmatprep.subr.mxu0 0.0
          %414 = vmatpush2.msra.mxu0 0.0
          %415 = vmatprep.subr.mxu0 0.0
          %416 = vmatpush2.msra.mxu0 0.0
          %417 = vmatprep.subr.mxu0 0.0
          %418 = vmatpush2.msra.mxu0 0.0
          %419 = vmatprep.subr.mxu0 0.0
          %420 = vmatpush2.msra.mxu0 0.0
          %421 = vmatprep.subr.mxu0 0.0
          %422 = vmatpush2.msra.mxu0 0.0
          %423 = vmatprep.subr.mxu0 0.0
          %424 = vmatpush2.msra.mxu0 0.0
          %425 = vmatprep.subr.mxu0 0.0
          %426 = vmatpush2.msra.mxu0 0.0
          %427 = vmatprep.subr.mxu0 0.0
          %428 = vmatpush2.msra.mxu0 0.0
          %429 = vmatprep.subr.mxu0 0.0
          %430 = vmatpush2.msra.mxu0 0.0
          %431 = vmatprep.mubr.f32.mxu0 0.0
          %432 = vmatmul.mubr.f32.gmra.mxu0 %v365
          %v433 = vpop.f32.mrf.mxu0
          %v434 = vadd.f32 %v361, %v433
          %v435 = vpop.f32.mrf.mxu0
          %436 = vdwg.mxu0
          %437 = vst.msk [vmem:[#allocation2] sm:$0xff] %vm363, %v434
        $region64: #{tpu_custom_call.1} parent=43 // pred_fallthru
          _
        %v438 = vld [vmem:[%s297] sm:$0xff]
        %v439 = vld [vmem:[#allocation7] sm:$0xff]
        %v440 = vld [vmem:[#allocation7 + $0x8] sm:$0xff]
        %v441 = vld [vmem:[#allocation7 + $0x10] sm:$0xff]
        %v442 = vld [vmem:[#allocation7 + $0x18] sm:$0xff]
        %v443 = vld [vmem:[%s3] sm:$0x1]
        %v445 = vlaneseq
        %v446 = vshrl.u32 %v445, 7
        %v447 = vsub.s32 0, %v446
        %v448 = vrot.slane %v443, %v447
        %vm450 = vcmask 261120
        %v452 = vsel %vm450, %v438, 0
        %454 = vmatprep.subr.mxu0 0.0
        %455 = vmatpush1.msra.mxu0 0.0
        %456 = vmatprep.subr.mxu0 0.0
        %457 = vmatpush1.msra.mxu0 0.0
        %458 = vmatprep.subr.mxu0 0.0
        %459 = vmatpush1.msra.mxu0 0.0
        %460 = vmatprep.subr.mxu0 0.0
        %461 = vmatpush1.msra.mxu0 0.0
        %462 = vmatprep.subr.mxu0 0.0
        %463 = vmatpush1.msra.mxu0 0.0
        %464 = vmatprep.subr.mxu0 0.0
        %465 = vmatpush1.msra.mxu0 0.0
        %466 = vmatprep.subr.mxu0 0.0
        %467 = vmatpush1.msra.mxu0 0.0
        %468 = vmatprep.subr.mxu0 0.0
        %469 = vmatpush1.msra.mxu0 0.0
        %470 = vmatprep.subr.mxu0 0.0
        %471 = vmatpush1.msra.mxu0 0.0
        %472 = vmatprep.subr.mxu0 0.0
        %473 = vmatpush1.msra.mxu0 0.0
        %474 = vmatprep.subr.mxu0 0.0
        %475 = vmatpush1.msra.mxu0 0.0
        %476 = vmatprep.subr.mxu0 0.0
        %477 = vmatpush1.msra.mxu0 0.0
        %478 = vmatprep.subr.mxu0 0.0
        %479 = vmatpush1.msra.mxu0 %v442
        %480 = vmatprep.subr.mxu0 0.0
        %481 = vmatpush1.msra.mxu0 %v441
        %482 = vmatprep.subr.mxu0 0.0
        %483 = vmatpush1.msra.mxu0 %v440
        %484 = vmatprep.subr.mxu0 0.0
        %485 = vmatpush1.msra.mxu0 %v439
        %486 = vmatprep.subr.mxu0 0.0
        %487 = vmatpush2.msra.mxu0 0.0
        %488 = vmatprep.subr.mxu0 0.0
        %489 = vmatpush2.msra.mxu0 0.0
        %490 = vmatprep.subr.mxu0 0.0
        %491 = vmatpush2.msra.mxu0 0.0
        %492 = vmatprep.subr.mxu0 0.0
        %493 = vmatpush2.msra.mxu0 0.0
        %494 = vmatprep.subr.mxu0 0.0
        %495 = vmatpush2.msra.mxu0 0.0
        %496 = vmatprep.subr.mxu0 0.0
        %497 = vmatpush2.msra.mxu0 0.0
        %498 = vmatprep.subr.mxu0 0.0
        %499 = vmatpush2.msra.mxu0 0.0
        %500 = vmatprep.subr.mxu0 0.0
        %501 = vmatpush2.msra.mxu0 0.0
        %502 = vmatprep.subr.mxu0 0.0
        %503 = vmatpush2.msra.mxu0 0.0
        %504 = vmatprep.subr.mxu0 0.0
        %505 = vmatpush2.msra.mxu0 0.0
        %506 = vmatprep.subr.mxu0 0.0
        %507 = vmatpush2.msra.mxu0 0.0
        %508 = vmatprep.subr.mxu0 0.0
        %509 = vmatpush2.msra.mxu0 0.0
        %510 = vmatprep.subr.mxu0 0.0
        %511 = vmatpush2.msra.mxu0 0.0
        %512 = vmatprep.subr.mxu0 0.0
        %513 = vmatpush2.msra.mxu0 0.0
        %514 = vmatprep.subr.mxu0 0.0
        %515 = vmatpush2.msra.mxu0 0.0
        %516 = vmatprep.subr.mxu0 0.0
        %517 = vmatpush2.msra.mxu0 0.0
        %518 = vmatprep.mubr.f32.mxu0 0.0
        %519 = vmatmul.mubr.f32.gmra.mxu0 %v452
        %v520 = vpop.f32.mrf.mxu0
        %v521 = vadd.f32 %v448, %v520
        %v522 = vpop.f32.mrf.mxu0
        %523 = vdwg.mxu0
        %v524 = vld [vmem:[#allocation2] sm:$0xff]
        %vm525 = vcmask 64512
        %v527 = vsel %vm525, %v521, 0
        %v530 = vsel %vm525, %v524, 0
        %532 = vmatprep.subr.mxu0 0.0
        %533 = vmatpush1.xpose.msra.mxu0 0.0
        %534 = vmatprep.subr.mxu0 0.0
        %535 = vmatpush1.xpose.msra.mxu0 0.0
        %536 = vmatprep.subr.mxu0 0.0
        %537 = vmatpush1.xpose.msra.mxu0 0.0
        %538 = vmatprep.subr.mxu0 0.0
        %539 = vmatpush1.xpose.msra.mxu0 0.0
        %540 = vmatprep.subr.mxu0 0.0
        %541 = vmatpush1.xpose.msra.mxu0 0.0
        %542 = vmatprep.subr.mxu0 0.0
        %543 = vmatpush1.xpose.msra.mxu0 0.0
        %544 = vmatprep.subr.mxu0 0.0
        %545 = vmatpush1.xpose.msra.mxu0 0.0
        %546 = vmatprep.subr.mxu0 0.0
        %547 = vmatpush1.xpose.msra.mxu0 0.0
        %548 = vmatprep.subr.mxu0 0.0
        %549 = vmatpush1.xpose.msra.mxu0 0.0
        %550 = vmatprep.subr.mxu0 0.0
        %551 = vmatpush1.xpose.msra.mxu0 0.0
        %552 = vmatprep.subr.mxu0 0.0
        %553 = vmatpush1.xpose.msra.mxu0 0.0
        %554 = vmatprep.subr.mxu0 0.0
        %555 = vmatpush1.xpose.msra.mxu0 0.0
        %556 = vmatprep.subr.mxu0 0.0
        %557 = vmatpush1.xpose.msra.mxu0 0.0
        %558 = vmatprep.subr.mxu0 0.0
        %559 = vmatpush1.xpose.msra.mxu0 0.0
        %560 = vmatprep.subr.mxu0 0.0
        %561 = vmatpush1.xpose.msra.mxu0 0.0
        %562 = vmatprep.subr.mxu0 0.0
        %563 = vmatpush1.xpose.msra.mxu0 %v530
        %564 = vmatprep.subr.mxu0 0.0
        %565 = vmatpush2.xpose.msra.mxu0 0.0
        %566 = vmatprep.subr.mxu0 0.0
        %567 = vmatpush2.xpose.msra.mxu0 0.0
        %568 = vmatprep.subr.mxu0 0.0
        %569 = vmatpush2.xpose.msra.mxu0 0.0
        %570 = vmatprep.subr.mxu0 0.0
        %571 = vmatpush2.xpose.msra.mxu0 0.0
        %572 = vmatprep.subr.mxu0 0.0
        %573 = vmatpush2.xpose.msra.mxu0 0.0
        %574 = vmatprep.subr.mxu0 0.0
        %575 = vmatpush2.xpose.msra.mxu0 0.0
        %576 = vmatprep.subr.mxu0 0.0
        %577 = vmatpush2.xpose.msra.mxu0 0.0
        %578 = vmatprep.subr.mxu0 0.0
        %579 = vmatpush2.xpose.msra.mxu0 0.0
        %580 = vmatprep.subr.mxu0 0.0
        %581 = vmatpush2.xpose.msra.mxu0 0.0
        %582 = vmatprep.subr.mxu0 0.0
        %583 = vmatpush2.xpose.msra.mxu0 0.0
        %584 = vmatprep.subr.mxu0 0.0
        %585 = vmatpush2.xpose.msra.mxu0 0.0
        %586 = vmatprep.subr.mxu0 0.0
        %587 = vmatpush2.xpose.msra.mxu0 0.0
        %588 = vmatprep.subr.mxu0 0.0
        %589 = vmatpush2.xpose.msra.mxu0 0.0
        %590 = vmatprep.subr.mxu0 0.0
        %591 = vmatpush2.xpose.msra.mxu0 0.0
        %592 = vmatprep.subr.mxu0 0.0
        %593 = vmatpush2.xpose.msra.mxu0 0.0
        %594 = vmatprep.subr.mxu0 0.0
        %595 = vmatpush2.xpose.msra.mxu0 0.0
        %596 = vmatprep.mubr.f32.mxu0 0.0
        %597 = vmatmul.mubr.f32.gmra.mxu0 %v527
        %v598 = vpop.f32.mrf.mxu0
        %v599 = vadd.f32 0.0, %v598
        %v600 = vpop.f32.mrf.mxu0
        %601 = vdwg.mxu0
        %602 = vst.msk [vmem:[%s346] sm:$0xff] %vm525, %v599
        %603 = vrot.lane.b32.xlu0 %v521, 120
        %v604 = vpop.permute.xlu0 %603
        %605 = vrot.lane.b32.xlu0 %v524, 120
        %v606 = vpop.permute.xlu0 %605
        %v607 = vsel %vm525, %v604, 0
        %v609 = vsel %vm525, %v606, 0
        %611 = vmatprep.subr.mxu0 0.0
        %612 = vmatpush1.xpose.msra.mxu0 0.0
        %613 = vmatprep.subr.mxu0 0.0
        %614 = vmatpush1.xpose.msra.mxu0 0.0
        %615 = vmatprep.subr.mxu0 0.0
        %616 = vmatpush1.xpose.msra.mxu0 0.0
        %617 = vmatprep.subr.mxu0 0.0
        %618 = vmatpush1.xpose.msra.mxu0 0.0
        %619 = vmatprep.subr.mxu0 0.0
        %620 = vmatpush1.xpose.msra.mxu0 0.0
        %621 = vmatprep.subr.mxu0 0.0
        %622 = vmatpush1.xpose.msra.mxu0 0.0
        %623 = vmatprep.subr.mxu0 0.0
        %624 = vmatpush1.xpose.msra.mxu0 0.0
        %625 = vmatprep.subr.mxu0 0.0
        %626 = vmatpush1.xpose.msra.mxu0 0.0
        %627 = vmatprep.subr.mxu0 0.0
        %628 = vmatpush1.xpose.msra.mxu0 0.0
        %629 = vmatprep.subr.mxu0 0.0
        %630 = vmatpush1.xpose.msra.mxu0 0.0
        %631 = vmatprep.subr.mxu0 0.0
        %632 = vmatpush1.xpose.msra.mxu0 0.0
        %633 = vmatprep.subr.mxu0 0.0
        %634 = vmatpush1.xpose.msra.mxu0 0.0
        %635 = vmatprep.subr.mxu0 0.0
        %636 = vmatpush1.xpose.msra.mxu0 0.0
        %637 = vmatprep.subr.mxu0 0.0
        %638 = vmatpush1.xpose.msra.mxu0 0.0
        %639 = vmatprep.subr.mxu0 0.0
        %640 = vmatpush1.xpose.msra.mxu0 0.0
        %641 = vmatprep.subr.mxu0 0.0
        %642 = vmatpush1.xpose.msra.mxu0 %v609
        %643 = vmatprep.subr.mxu0 0.0
        %644 = vmatpush2.xpose.msra.mxu0 0.0
        %645 = vmatprep.subr.mxu0 0.0
        %646 = vmatpush2.xpose.msra.mxu0 0.0
        %647 = vmatprep.subr.mxu0 0.0
        %648 = vmatpush2.xpose.msra.mxu0 0.0
        %649 = vmatprep.subr.mxu0 0.0
        %650 = vmatpush2.xpose.msra.mxu0 0.0
        %651 = vmatprep.subr.mxu0 0.0
        %652 = vmatpush2.xpose.msra.mxu0 0.0
        %653 = vmatprep.subr.mxu0 0.0
        %654 = vmatpush2.xpose.msra.mxu0 0.0
        %655 = vmatprep.subr.mxu0 0.0
        %656 = vmatpush2.xpose.msra.mxu0 0.0
        %657 = vmatprep.subr.mxu0 0.0
        %658 = vmatpush2.xpose.msra.mxu0 0.0
        %659 = vmatprep.subr.mxu0 0.0
        %660 = vmatpush2.xpose.msra.mxu0 0.0
        %661 = vmatprep.subr.mxu0 0.0
        %662 = vmatpush2.xpose.msra.mxu0 0.0
        %663 = vmatprep.subr.mxu0 0.0
        %664 = vmatpush2.xpose.msra.mxu0 0.0
        %665 = vmatprep.subr.mxu0 0.0
        %666 = vmatpush2.xpose.msra.mxu0 0.0
        %667 = vmatprep.subr.mxu0 0.0
        %668 = vmatpush2.xpose.msra.mxu0 0.0
        %669 = vmatprep.subr.mxu0 0.0
        %670 = vmatpush2.xpose.msra.mxu0 0.0
        %671 = vmatprep.subr.mxu0 0.0
        %672 = vmatpush2.xpose.msra.mxu0 0.0
        %673 = vmatprep.subr.mxu0 0.0
        %674 = vmatpush2.xpose.msra.mxu0 0.0
        %675 = vmatprep.mubr.f32.mxu0 0.0
        %676 = vmatmul.mubr.f32.gmra.mxu0 %v607
        %v677 = vpop.f32.mrf.mxu0
        %v678 = vadd.f32 0.0, %v677
        %v679 = vpop.f32.mrf.mxu0
        %680 = vdwg.mxu0
        %s681 = scalar_lea.vmem %s346, 8 [#allocation10]
        %682 = vst.msk [vmem:[%s681] sm:$0xff] %vm525, %v678
        %683 = vrot.lane.b32.xlu0 %v521, 112
        %v684 = vpop.permute.xlu0 %683
        %685 = vrot.lane.b32.xlu0 %v524, 112
        %v686 = vpop.permute.xlu0 %685
        %v687 = vsel %vm525, %v684, 0
        %v689 = vsel %vm525, %v686, 0
        %691 = vmatprep.subr.mxu0 0.0
        %692 = vmatpush1.xpose.msra.mxu0 0.0
        %693 = vmatprep.subr.mxu0 0.0
        %694 = vmatpush1.xpose.msra.mxu0 0.0
        %695 = vmatprep.subr.mxu0 0.0
        %696 = vmatpush1.xpose.msra.mxu0 0.0
        %697 = vmatprep.subr.mxu0 0.0
        %698 = vmatpush1.xpose.msra.mxu0 0.0
        %699 = vmatprep.subr.mxu0 0.0
        %700 = vmatpush1.xpose.msra.mxu0 0.0
        %701 = vmatprep.subr.mxu0 0.0
        %702 = vmatpush1.xpose.msra.mxu0 0.0
        %703 = vmatprep.subr.mxu0 0.0
        %704 = vmatpush1.xpose.msra.mxu0 0.0
        %705 = vmatprep.subr.mxu0 0.0
        %706 = vmatpush1.xpose.msra.mxu0 0.0
        %707 = vmatprep.subr.mxu0 0.0
        %708 = vmatpush1.xpose.msra.mxu0 0.0
        %709 = vmatprep.subr.mxu0 0.0
        %710 = vmatpush1.xpose.msra.mxu0 0.0
        %711 = vmatprep.subr.mxu0 0.0
        %712 = vmatpush1.xpose.msra.mxu0 0.0
        %713 = vmatprep.subr.mxu0 0.0
        %714 = vmatpush1.xpose.msra.mxu0 0.0
        %715 = vmatprep.subr.mxu0 0.0
        %716 = vmatpush1.xpose.msra.mxu0 0.0
        %717 = vmatprep.subr.mxu0 0.0
        %718 = vmatpush1.xpose.msra.mxu0 0.0
        %719 = vmatprep.subr.mxu0 0.0
        %720 = vmatpush1.xpose.msra.mxu0 0.0
        %721 = vmatprep.subr.mxu0 0.0
        %722 = vmatpush1.xpose.msra.mxu0 %v689
        %723 = vmatprep.subr.mxu0 0.0
        %724 = vmatpush2.xpose.msra.mxu0 0.0
        %725 = vmatprep.subr.mxu0 0.0
        %726 = vmatpush2.xpose.msra.mxu0 0.0
        %727 = vmatprep.subr.mxu0 0.0
        %728 = vmatpush2.xpose.msra.mxu0 0.0
        %729 = vmatprep.subr.mxu0 0.0
        %730 = vmatpush2.xpose.msra.mxu0 0.0
        %731 = vmatprep.subr.mxu0 0.0
        %732 = vmatpush2.xpose.msra.mxu0 0.0
        %733 = vmatprep.subr.mxu0 0.0
        %734 = vmatpush2.xpose.msra.mxu0 0.0
        %735 = vmatprep.subr.mxu0 0.0
        %736 = vmatpush2.xpose.msra.mxu0 0.0
        %737 = vmatprep.subr.mxu0 0.0
        %738 = vmatpush2.xpose.msra.mxu0 0.0
        %739 = vmatprep.subr.mxu0 0.0
        %740 = vmatpush2.xpose.msra.mxu0 0.0
        %741 = vmatprep.subr.mxu0 0.0
        %742 = vmatpush2.xpose.msra.mxu0 0.0
        %743 = vmatprep.subr.mxu0 0.0
        %744 = vmatpush2.xpose.msra.mxu0 0.0
        %745 = vmatprep.subr.mxu0 0.0
        %746 = vmatpush2.xpose.msra.mxu0 0.0
        %747 = vmatprep.subr.mxu0 0.0
        %748 = vmatpush2.xpose.msra.mxu0 0.0
        %749 = vmatprep.subr.mxu0 0.0
        %750 = vmatpush2.xpose.msra.mxu0 0.0
        %751 = vmatprep.subr.mxu0 0.0
        %752 = vmatpush2.xpose.msra.mxu0 0.0
        %753 = vmatprep.subr.mxu0 0.0
        %754 = vmatpush2.xpose.msra.mxu0 0.0
        %755 = vmatprep.mubr.f32.mxu0 0.0
        %756 = vmatmul.mubr.f32.gmra.mxu0 %v687
        %v757 = vpop.f32.mrf.mxu0
        %v758 = vadd.f32 0.0, %v757
        %v759 = vpop.f32.mrf.mxu0
        %760 = vdwg.mxu0
        %s761 = scalar_lea.vmem %s346, 16 [#allocation10]
        %762 = vst.msk [vmem:[%s761] sm:$0xff] %vm525, %v758
        %763 = vrot.lane.b32.xlu0 %v521, 104
        %v764 = vpop.permute.xlu0 %763
        %765 = vrot.lane.b32.xlu0 %v524, 104
        %v766 = vpop.permute.xlu0 %765
        %v767 = vsel %vm525, %v764, 0
        %v769 = vsel %vm525, %v766, 0
        %771 = vmatprep.subr.mxu0 0.0
        %772 = vmatpush1.xpose.msra.mxu0 0.0
        %773 = vmatprep.subr.mxu0 0.0
        %774 = vmatpush1.xpose.msra.mxu0 0.0
        %775 = vmatprep.subr.mxu0 0.0
        %776 = vmatpush1.xpose.msra.mxu0 0.0
        %777 = vmatprep.subr.mxu0 0.0
        %778 = vmatpush1.xpose.msra.mxu0 0.0
        %779 = vmatprep.subr.mxu0 0.0
        %780 = vmatpush1.xpose.msra.mxu0 0.0
        %781 = vmatprep.subr.mxu0 0.0
        %782 = vmatpush1.xpose.msra.mxu0 0.0
        %783 = vmatprep.subr.mxu0 0.0
        %784 = vmatpush1.xpose.msra.mxu0 0.0
        %785 = vmatprep.subr.mxu0 0.0
        %786 = vmatpush1.xpose.msra.mxu0 0.0
        %787 = vmatprep.subr.mxu0 0.0
        %788 = vmatpush1.xpose.msra.mxu0 0.0
        %789 = vmatprep.subr.mxu0 0.0
        %790 = vmatpush1.xpose.msra.mxu0 0.0
        %791 = vmatprep.subr.mxu0 0.0
        %792 = vmatpush1.xpose.msra.mxu0 0.0
        %793 = vmatprep.subr.mxu0 0.0
        %794 = vmatpush1.xpose.msra.mxu0 0.0
        %795 = vmatprep.subr.mxu0 0.0
        %796 = vmatpush1.xpose.msra.mxu0 0.0
        %797 = vmatprep.subr.mxu0 0.0
        %798 = vmatpush1.xpose.msra.mxu0 0.0
        %799 = vmatprep.subr.mxu0 0.0
        %800 = vmatpush1.xpose.msra.mxu0 0.0
        %801 = vmatprep.subr.mxu0 0.0
        %802 = vmatpush1.xpose.msra.mxu0 %v769
        %803 = vmatprep.subr.mxu0 0.0
        %804 = vmatpush2.xpose.msra.mxu0 0.0
        %805 = vmatprep.subr.mxu0 0.0
        %806 = vmatpush2.xpose.msra.mxu0 0.0
        %807 = vmatprep.subr.mxu0 0.0
        %808 = vmatpush2.xpose.msra.mxu0 0.0
        %809 = vmatprep.subr.mxu0 0.0
        %810 = vmatpush2.xpose.msra.mxu0 0.0
        %811 = vmatprep.subr.mxu0 0.0
        %812 = vmatpush2.xpose.msra.mxu0 0.0
        %813 = vmatprep.subr.mxu0 0.0
        %814 = vmatpush2.xpose.msra.mxu0 0.0
        %815 = vmatprep.subr.mxu0 0.0
        %816 = vmatpush2.xpose.msra.mxu0 0.0
        %817 = vmatprep.subr.mxu0 0.0
        %818 = vmatpush2.xpose.msra.mxu0 0.0
        %819 = vmatprep.subr.mxu0 0.0
        %820 = vmatpush2.xpose.msra.mxu0 0.0
        %821 = vmatprep.subr.mxu0 0.0
        %822 = vmatpush2.xpose.msra.mxu0 0.0
        %823 = vmatprep.subr.mxu0 0.0
        %824 = vmatpush2.xpose.msra.mxu0 0.0
        %825 = vmatprep.subr.mxu0 0.0
        %826 = vmatpush2.xpose.msra.mxu0 0.0
        %827 = vmatprep.subr.mxu0 0.0
        %828 = vmatpush2.xpose.msra.mxu0 0.0
        %829 = vmatprep.subr.mxu0 0.0
        %830 = vmatpush2.xpose.msra.mxu0 0.0
        %831 = vmatprep.subr.mxu0 0.0
        %832 = vmatpush2.xpose.msra.mxu0 0.0
        %833 = vmatprep.subr.mxu0 0.0
        %834 = vmatpush2.xpose.msra.mxu0 0.0
        %835 = vmatprep.mubr.f32.mxu0 0.0
        %836 = vmatmul.mubr.f32.gmra.mxu0 %v767
        %v837 = vpop.f32.mrf.mxu0
        %v838 = vadd.f32 0.0, %v837
        %v839 = vpop.f32.mrf.mxu0
        %840 = vdwg.mxu0
        %s841 = scalar_lea.vmem %s346, 24 [#allocation10]
        %842 = vst.msk [vmem:[%s841] sm:$0xff] %vm525, %v838
        %s843 = sand.u32 %s184, 1
        %s844 = sand.u32 %s184, 1
        %s845 = smul.addr %s844, 32
        %s846 = scalar_lea.vmem [#allocation10], %s845
        // Predicated region
        $region65: #{tpu_custom_call.1} parent=43 // pred_check
          %p847 = pneg %p194
        $region66: #{tpu_custom_call.1} parent=43 // pred_check_branch
          %849 = sbr.rel (%p847) target = $region68
        $region67: #{tpu_custom_call.1} parent=43 // pred_region
          %s850 = smul.addr %s28, 8
          %s851 = sadd.s32 %s29, %s850
          %s852 = smul.addr %s851, 8
          %s853 = scalar_lea.vmem %s6, %s852
          // Predicated region
          $region69: #{tpu_custom_call.1} parent=67 // pred_check
            _
          $region70: #{tpu_custom_call.1} parent=67 // pred_check_branch
            %855 = sbr.rel (0) target = $region72
          $region71: #{tpu_custom_call.1} parent=67 // pred_region
            // Predicated region
            $region73: #{tpu_custom_call.1} parent=71 // pred_check
              _
            $region74: #{tpu_custom_call.1} parent=71 // pred_check_branch
              %857 = sbr.rel (0) target = $region76
            $region75: #{tpu_custom_call.1} parent=71 // pred_region
              // Predicated region
              $region88: #{tpu_custom_call.1} parent=75 // pred_check
                _
              $region89: #{tpu_custom_call.1} parent=75 // pred_check_branch
                %879 = sbr.rel (0) target = $region91
              $region90: #{tpu_custom_call.1} parent=75 // pred_region
                loop: start=0, step=1, limit=1
                $region92: #{tpu_custom_call.1} parent=90 // loop_pre_header
                  _
                $region93: #{tpu_custom_call.1} parent=90 // loop_header
                  %s881 = sphi 0, %s885
                  %p882 = scmp.ge.s32.totalorder %s881, 1
                  %s886 = sphi %s846, %s846
                  %s887 = sphi %s853, %s853
                $region94: #{tpu_custom_call.1} parent=90 // loop_header_branch
                  %884 = sbr.rel (%p882) target = $region98
                $region95: #{tpu_custom_call.1} parent=90 // loop_body
                  %v888 = vld [vmem:[%s886] sm:$0xff]
                  %889 = vst [vmem:[%s887] sm:$0xff] %v888
                  %v890 = vld [vmem:[%s886 + $0x8] sm:$0xff]
                  %891 = vst [vmem:[%s887 + $0x10] sm:$0xff] %v890
                  %v892 = vld [vmem:[%s886 + $0x10] sm:$0xff]
                  %893 = vst [vmem:[%s887 + $0x20] sm:$0xff] %v892
                  %v894 = vld [vmem:[%s886 + $0x18] sm:$0xff]
                  %895 = vst [vmem:[%s887 + $0x30] sm:$0xff] %v894
                $region96: #{tpu_custom_call.1} parent=90 // loop_footer
                  %s885 = sadd.s32 1, %s881
                $region97: #{tpu_custom_call.1} parent=90 // loop_footer_branch
                  %880 = sbr.rel target = $region93
                $region98: #{tpu_custom_call.1} parent=90 // loop_exit
                  _
              $region91: #{tpu_custom_call.1} parent=75 // pred_fallthru
                _
              // Predicated region
              $region99: #{tpu_custom_call.1} parent=75 // pred_check
                _
              $region100: #{tpu_custom_call.1} parent=75 // pred_check_branch
                %897 = sbr.rel target = $region102
              $region101: #{tpu_custom_call.1} parent=75 // pred_region
                _
              $region102: #{tpu_custom_call.1} parent=75 // pred_fallthru
                _
            $region76: #{tpu_custom_call.1} parent=71 // pred_fallthru
              _
            // Predicated region
            $region77: #{tpu_custom_call.1} parent=71 // pred_check
              _
            $region78: #{tpu_custom_call.1} parent=71 // pred_check_branch
              %859 = sbr.rel target = $region80
            $region79: #{tpu_custom_call.1} parent=71 // pred_region
              %s861 = ssub.s32 256, 1
              loop: start=0, step=1, limit=1
              $region81: #{tpu_custom_call.1} parent=79 // loop_pre_header
                _
              $region82: #{tpu_custom_call.1} parent=79 // loop_header
                %s863 = sphi 0, %s867
                %p864 = scmp.ge.s32.totalorder %s863, 1
                %s868 = sphi %s846, %s846
                %s869 = sphi %s853, %s853
              $region83: #{tpu_custom_call.1} parent=79 // loop_header_branch
                %866 = sbr.rel (%p864) target = $region87
              $region84: #{tpu_custom_call.1} parent=79 // loop_body
                %v870 = vld [vmem:[%s868] sm:%s861]
                %871 = vst [vmem:[%s869] sm:%s861] %v870
                %v872 = vld [vmem:[%s868 + $0x8] sm:%s861]
                %873 = vst [vmem:[%s869 + $0x10] sm:%s861] %v872
                %v874 = vld [vmem:[%s868 + $0x10] sm:%s861]
                %875 = vst [vmem:[%s869 + $0x20] sm:%s861] %v874
                %v876 = vld [vmem:[%s868 + $0x18] sm:%s861]
                %877 = vst [vmem:[%s869 + $0x30] sm:%s861] %v876
              $region85: #{tpu_custom_call.1} parent=79 // loop_footer
                %s867 = sadd.s32 1, %s863
              $region86: #{tpu_custom_call.1} parent=79 // loop_footer_branch
                %862 = sbr.rel target = $region82
              $region87: #{tpu_custom_call.1} parent=79 // loop_exit
                _
            $region80: #{tpu_custom_call.1} parent=71 // pred_fallthru
              _
          $region72: #{tpu_custom_call.1} parent=67 // pred_fallthru
            _
          %898 = vnop
        $region68: #{tpu_custom_call.1} parent=43 // pred_fallthru
          _
      $region44: #{tpu_custom_call.1} parent=5 // pred_fallthru
        _
      %p899 = scmp.le.s32.totalorder 2, %s19
      // Predicated region
      $region103: #{tpu_custom_call.1} parent=5 // pred_check
        %p900 = pneg %p899
      $region104: #{tpu_custom_call.1} parent=5 // pred_check_branch
        %902 = sbr.rel (%p900) target = $region106
      $region105: #{tpu_custom_call.1} parent=5 // pred_region
        %s903 = ssub.s32 %s19, 2
        // Predicated region
        $region107: #{tpu_custom_call.1} parent=105 // pred_check
          %p904 = pneg %p200
        $region108: #{tpu_custom_call.1} parent=105 // pred_check_branch
          %906 = sbr.rel (%p904) target = $region110
        $region109: #{tpu_custom_call.1} parent=105 // pred_region
          %s907 = sand.u32 %s185, 1
          %s908 = sand.u32 %s185, 1
          %s909 = smul.addr %s908, 32
          %s910 = scalar_lea.vmem [#allocation10], %s909
        $region110: #{tpu_custom_call.1} parent=105 // pred_fallthru
          _
      $region106: #{tpu_custom_call.1} parent=5 // pred_fallthru
        _
    $region6: #{tpu_custom_call.1} parent=1 // loop_footer
      %s23 = sadd.s32 1, %s19
    $region7: #{tpu_custom_call.1} parent=1 // loop_footer_branch
      %18 = sbr.rel target = $region3
    $region8: #{tpu_custom_call.1} parent=1 // loop_exit
      _
    %911 = vsyncpa [#allocation4], 1
    %s912 = scalar_lea.sflag [#allocation4], 1
    %913 = vsyncpa %s912, 1
    %914 = vsyncpa [#allocation6], 1
    %s915 = scalar_lea.sflag [#allocation6], 1
    %916 = vsyncpa %s915, 1
    %917 = vsyncpa [#allocation9], 1

// kernel: tpu_custom_call.1
$region0: #{tpu_custom_call.1}
  #allocation0 [shape = 'u32[]', space=smem, size = 0x4, offset = 0x4, fixed_abs, tag = 'smem constant byte address 0x4 - core index']
  #allocation1 [shape = 'u32[144,128]{1,0:T(1,128)}', space=vmem, size = 0x12000, scoped, tag = 'internal scratch']
  #allocation2 [shape = 'f32[8,32]{1,0:T(8,128)}', space=vmem, size = 0x1000, scoped, tag = 'scratch operand']
  %s0 = inlined_call_operand.hbm [shape: f32[2,16,32], index: 0, kind: input, shape index: {}]
  %s1 = inlined_call_operand.hbm [shape: f32[2,8,32], index: 1, kind: input, shape index: {}]
  %s2 = inlined_call_operand.hbm [shape: f32[32,32], index: 2, kind: input, shape index: {}]
  %s3 = inlined_call_operand.vmem [shape: f32[1,32], index: 3, kind: input, shape index: {}]
  %s4 = inlined_call_operand.hbm [shape: f32[32,32], index: 4, kind: input, shape index: {}]
  %s5 = inlined_call_operand.vmem [shape: f32[1,32], index: 5, kind: input, shape index: {}]
  %s6 = inlined_call_operand.vmem [shape: f32[2,4,16,8], index: 6, kind: output, shape index: {}]
  %s7 = sld [smem:[#allocation0]]
  $region111: #{tpu_custom_call.1} parent=0
    _
  %s9 = ssub.s32 1, %s7
  %s10 = scalar_select 0, %s9, %s7
  $region1: #{tpu_custom_call.1} parent=0
    #allocation3 [shape = 'u8[8192]{0}', space=vmem, size = 0x2000, scoped, tag = 'input window, operand 0']
    #allocation4 [shape = 's32[2]{0}', space=sflag, size = 0x8, scoped, tag = 'scoped memory for tpu_custom_call.1']
    #allocation5 [shape = 'u8[8192]{0}', space=vmem, size = 0x2000, scoped, tag = 'input window, operand 1']
    #allocation6 [shape = 's32[2]{0}', space=sflag, size = 0x8, scoped, tag = 'scoped memory for tpu_custom_call.1']
    #allocation7 [shape = 'u8[16384]{0}', space=vmem, size = 0x4000, scoped, tag = 'input window, operand 2, single buffered']
    #allocation8 [shape = 'u8[16384]{0}', space=vmem, size = 0x4000, scoped, tag = 'input window, operand 4, single buffered']
    #allocation9 [shape = 's32[1]{0}', space=sflag, size = 0x4, scoped, tag = 'scoped memory for tpu_custom_call.1']
    #allocation10 [shape = 'u8[32768]{0}', space=vmem, size = 0x8000, scoped, tag = 'output window, operand 0']
    %11 = vsyncpa [#allocation4], 0
    %s12 = scalar_lea.sflag [#allocation4], 1
    %13 = vsyncpa %s12, 0
    %14 = vsyncpa [#allocation6], 0
    %s15 = scalar_lea.sflag [#allocation6], 1
    %16 = vsyncpa %s15, 0
    %17 = vsyncpa [#allocation9], 0
    loop: start=0, step=1, limit=6
    $region2: #{tpu_custom_call.1} parent=1 // loop_pre_header
      _
    $region3: #{tpu_custom_call.1} parent=1 // loop_header
      %s19 = sphi 0, %s23
      %p20 = scmp.ge.s32.totalorder %s19, 6
      %s26 = sphi 0, %s38
      %s27 = sphi 0, %s34
      %s28 = sphi 0, %s26
      %s29 = sphi 0, %s27
      %s30 = sphi 0, %s28
      %s31 = sphi 0, %s29
      %s43 = sphi 0, %s45
      %s46 = sphi 0, %s43
      %s47 = sphi 0, %s46
      %s63 = sphi 0, %s47
      %s69 = sphi 0, %s71
      %s72 = sphi 0, %s69
      %s73 = sphi 0, %s72
      %s89 = sphi 0, %s73
      %s93 = sphi 0, %s93
      %s95 = sphi 0, %s93
      %s96 = sphi 0, %s95
      %s110 = sphi 0, %s96
      %s114 = sphi 0, %s114
      %s116 = sphi 0, %s114
      %s117 = sphi 0, %s116
      %s131 = sphi 0, %s117
      %s135 = sphi 0, %s135
      %s137 = sphi 0, %s135
      %s138 = sphi 0, %s137
      %s152 = sphi 0, %s138
      %s156 = sphi 0, %s156
      %s158 = sphi 0, %s156
      %s159 = sphi 0, %s158
      %s173 = sphi 0, %s159
      %s181 = sphi 0, %s183
      %s184 = sphi 0, %s181
      %s185 = sphi 0, %s184
      %s201 = sphi 0, %s185
    $region4: #{tpu_custom_call.1} parent=1 // loop_header_branch
      %22 = sbr.rel (%p20) target = $region8
    $region5: #{tpu_custom_call.1} parent=1 // loop_body
      %s24 = ssub.s32 %s19, 1
      %s25 = ssub.s32 %s19, 2
      %s32 = sadd.s32 1, %s27
      %p33 = scmp.ge.s32.totalorder %s32, 2
      %s34 = scalar_select %p33, 0, %s32
      %s35 = sadd.s32 1, %s26
      %s36 = scalar_select %p33, %s35, %s26
      %p37 = scmp.ge.s32.totalorder %s36, 2
      %s38 = scalar_select %p37, 0, %s36
      %s39 = ssub.s32 %s26, %s38
      %s40 = ssub.s32 %s27, %s34
      %s41 = sor.u32 %s39, %s40
      %p42 = scmp.eq.s32.totalorder %s41, 0
      %s44 = sadd.s32 %s43, 1
      %s45 = scalar_select %p42, %s43, %s44
      %p48 = pneg %p42
      %p49 = scmp.eq.s32.totalorder %s19, 3
      %p50 = por %p48, %p49
      %p51 = scmp.ne.s32.totalorder %s43, %s46
      %p52 = scmp.eq.s32.totalorder %s19, 0
      %p53 = por %p51, %p52
      %p54 = scmp.ne.s32.totalorder %s43, %s46
      %p55 = scmp.eq.s32.totalorder %s24, 3
      %p56 = por %p54, %p55
      %p57 = scmp.ne.s32.totalorder %s46, %s47
      %p58 = scmp.eq.s32.totalorder %s24, 0
      %p59 = por %p57, %p58
      %p60 = scmp.ne.s32.totalorder %s46, %s47
      %p61 = scmp.eq.s32.totalorder %s25, 3
      %p62 = por %p60, %p61
      %p64 = scmp.ne.s32.totalorder %s47, %s63
      %p65 = scmp.eq.s32.totalorder %s25, 0
      %p66 = por %p64, %p65
      %s67 = ssub.s32 %s26, %s38
      %p68 = scmp.eq.s32.totalorder %s67, 0
      %s70 = sadd.s32 %s69, 1
      %s71 = scalar_select %p68, %s69, %s70
      %p74 = pneg %p68
      %p75 = scmp.eq.s32.totalorder %s19, 3
      %p76 = por %p74, %p75
      %p77 = scmp.ne.s32.totalorder %s69, %s72
      %p78 = scmp.eq.s32.totalorder %s19, 0
      %p79 = por %p77, %p78
      %p80 = scmp.ne.s32.totalorder %s69, %s72
      %p81 = scmp.eq.s32.totalorder %s24, 3
      %p82 = por %p80, %p81
      %p83 = scmp.ne.s32.totalorder %s72, %s73
      %p84 = scmp.eq.s32.totalorder %s24, 0
      %p85 = por %p83, %p84
      %p86 = scmp.ne.s32.totalorder %s72, %s73
      %p87 = scmp.eq.s32.totalorder %s25, 3
      %p88 = por %p86, %p87
      %p90 = scmp.ne.s32.totalorder %s73, %s89
      %p91 = scmp.eq.s32.totalorder %s25, 0
      %p92 = por %p90, %p91
      %s94 = sadd.s32 %s93, 1
      %p97 = scmp.eq.s32.totalorder %s19, 3
      %p98 = scmp.ne.s32.totalorder %s93, %s95
      %p99 = scmp.eq.s32.totalorder %s19, 0
      %p100 = por %p98, %p99
      %p101 = scmp.ne.s32.totalorder %s93, %s95
      %p102 = scmp.eq.s32.totalorder %s24, 3
      %p103 = por %p101, %p102
      %p104 = scmp.ne.s32.totalorder %s95, %s96
      %p105 = scmp.eq.s32.totalorder %s24, 0
      %p106 = por %p104, %p105
      %p107 = scmp.ne.s32.totalorder %s95, %s96
      %p108 = scmp.eq.s32.totalorder %s25, 3
      %p109 = por %p107, %p108
      %p111 = scmp.ne.s32.totalorder %s96, %s110
      %p112 = scmp.eq.s32.totalorder %s25, 0
      %p113 = por %p111, %p112
      %s115 = sadd.s32 %s114, 1
      %p118 = scmp.eq.s32.totalorder %s19, 3
      %p119 = scmp.ne.s32.totalorder %s114, %s116
      %p120 = scmp.eq.s32.totalorder %s19, 0
      %p121 = por %p119, %p120
      %p122 = scmp.ne.s32.totalorder %s114, %s116
      %p123 = scmp.eq.s32.totalorder %s24, 3
      %p124 = por %p122, %p123
      %p125 = scmp.ne.s32.totalorder %s116, %s117
      %p126 = scmp.eq.s32.totalorder %s24, 0
      %p127 = por %p125, %p126
      %p128 = scmp.ne.s32.totalorder %s116, %s117
      %p129 = scmp.eq.s32.totalorder %s25, 3
      %p130 = por %p128, %p129
      %p132 = scmp.ne.s32.totalorder %s117, %s131
      %p133 = scmp.eq.s32.totalorder %s25, 0
      %p134 = por %p132, %p133
      %s136 = sadd.s32 %s135, 1
      %p139 = scmp.eq.s32.totalorder %s19, 3
      %p140 = scmp.ne.s32.totalorder %s135, %s137
      %p141 = scmp.eq.s32.totalorder %s19, 0
      %p142 = por %p140, %p141
      %p143 = scmp.ne.s32.totalorder %s135, %s137
      %p144 = scmp.eq.s32.totalorder %s24, 3
      %p145 = por %p143, %p144
      %p146 = scmp.ne.s32.totalorder %s137, %s138
      %p147 = scmp.eq.s32.totalorder %s24, 0
      %p148 = por %p146, %p147
      %p149 = scmp.ne.s32.totalorder %s137, %s138
      %p150 = scmp.eq.s32.totalorder %s25, 3
      %p151 = por %p149, %p150
      %p153 = scmp.ne.s32.totalorder %s138, %s152
      %p154 = scmp.eq.s32.totalorder %s25, 0
      %p155 = por %p153, %p154
      %s157 = sadd.s32 %s156, 1
      %p160 = scmp.eq.s32.totalorder %s19, 3
      %p161 = scmp.ne.s32.totalorder %s156, %s158
      %p162 = scmp.eq.s32.totalorder %s19, 0
      %p163 = por %p161, %p162
      %p164 = scmp.ne.s32.totalorder %s156, %s158
      %p165 = scmp.eq.s32.totalorder %s24, 3
      %p166 = por %p164, %p165
      %p167 = scmp.ne.s32.totalorder %s158, %s159
      %p168 = scmp.eq.s32.totalorder %s24, 0
      %p169 = por %p167, %p168
      %p170 = scmp.ne.s32.totalorder %s158, %s159
      %p171 = scmp.eq.s32.totalorder %s25, 3
      %p172 = por %p170, %p171
      %p174 = scmp.ne.s32.totalorder %s159, %s173
      %p175 = scmp.eq.s32.totalorder %s25, 0
      %p176 = por %p174, %p175
      %s177 = ssub.s32 %s26, %s38
      %s178 = ssub.s32 %s27, %s34
      %s179 = sor.u32 %s177, %s178
      %p180 = scmp.eq.s32.totalorder %s179, 0
      %s182 = sadd.s32 %s181, 1
      %s183 = scalar_select %p180, %s181, %s182
      %p186 = pneg %p180
      %p187 = scmp.eq.s32.totalorder %s19, 3
      %p188 = por %p186, %p187
      %p189 = scmp.ne.s32.totalorder %s181, %s184
      %p190 = scmp.eq.s32.totalorder %s19, 0
      %p191 = por %p189, %p190
      %p192 = scmp.ne.s32.totalorder %s181, %s184
      %p193 = scmp.eq.s32.totalorder %s24, 3
      %p194 = por %p192, %p193
      %p195 = scmp.ne.s32.totalorder %s184, %s185
      %p196 = scmp.eq.s32.totalorder %s24, 0
      %p197 = por %p195, %p196
      %p198 = scmp.ne.s32.totalorder %s184, %s185
      %p199 = scmp.eq.s32.totalorder %s25, 3
      %p200 = por %p198, %p199
      %p202 = scmp.ne.s32.totalorder %s185, %s201
      %p203 = scmp.eq.s32.totalorder %s25, 0
      %p204 = por %p202, %p203
      %p205 = scmp.le.s32.totalorder 1, %s19
      %p206 = scmp.lt.s32.totalorder %s19, 5
      %p207 = pnand %p205, %p206
      %p208 = pneg %p207
      // Predicated region
      $region9: #{tpu_custom_call.1} parent=5 // pred_check
        _
      $region10: #{tpu_custom_call.1} parent=5 // pred_check_branch
        %210 = sbr.rel (%p207) target = $region12
      $region11: #{tpu_custom_call.1} parent=5 // pred_region
        %s211 = ssub.s32 %s19, 1
        // Predicated region
        $region13: #{tpu_custom_call.1} parent=11 // pred_check
          %p212 = pneg %p106
        $region14: #{tpu_custom_call.1} parent=11 // pred_check_branch
          %214 = sbr.rel (%p212) target = $region16
        $region15: #{tpu_custom_call.1} parent=11 // pred_region
          %s216 = ssub.s32 512, 512
          %217 = vsyncadd [#allocation6], %s216
          %s218 = sshll.u32 [#allocation7], 4
          %s219 = int_to_ptr.vmem [resolvable:$true] %s218
          %224 = dma.hbm_to_vmem [thread:$0]  %s2, 512, %s219, [#allocation6], 128, 128, 8
        $region16: #{tpu_custom_call.1} parent=11 // pred_fallthru
          _
        // Predicated region
        $region17: #{tpu_custom_call.1} parent=11 // pred_check
          %p225 = pneg %p127
        $region18: #{tpu_custom_call.1} parent=11 // pred_check_branch
          %227 = sbr.rel (%p225) target = $region20
        $region19: #{tpu_custom_call.1} parent=11 // pred_region
          _
        $region20: #{tpu_custom_call.1} parent=11 // pred_fallthru
          _
        // Predicated region
        $region21: #{tpu_custom_call.1} parent=11 // pred_check
          %p228 = pneg %p148
        $region22: #{tpu_custom_call.1} parent=11 // pred_check_branch
          %230 = sbr.rel (%p228) target = $region24
        $region23: #{tpu_custom_call.1} parent=11 // pred_region
          %s232 = ssub.s32 512, 512
          %233 = vsyncadd [#allocation9], %s232
          %s234 = sshll.u32 [#allocation8], 4
          %s235 = int_to_ptr.vmem [resolvable:$true] %s234
          %240 = dma.hbm_to_vmem [thread:$0]  %s4, 512, %s235, [#allocation9], 128, 128, 8
        $region24: #{tpu_custom_call.1} parent=11 // pred_fallthru
          _
        // Predicated region
        $region25: #{tpu_custom_call.1} parent=11 // pred_check
          %p241 = pneg %p169
        $region26: #{tpu_custom_call.1} parent=11 // pred_check_branch
          %243 = sbr.rel (%p241) target = $region28
        $region27: #{tpu_custom_call.1} parent=11 // pred_region
          _
        $region28: #{tpu_custom_call.1} parent=11 // pred_fallthru
          _
      $region12: #{tpu_custom_call.1} parent=5 // pred_fallthru
        _
      %p244 = scmp.lt.s32.totalorder %s19, 4
      // Predicated region
      $region29: #{tpu_custom_call.1} parent=5 // pred_check
        %p245 = pneg %p244
      $region30: #{tpu_custom_call.1} parent=5 // pred_check_branch
        %247 = sbr.rel (%p245) target = $region32
      $region31: #{tpu_custom_call.1} parent=5 // pred_region
        // Predicated region
        $region33: #{tpu_custom_call.1} parent=31 // pred_check
          %p248 = pneg %p53
        $region34: #{tpu_custom_call.1} parent=31 // pred_check_branch
          %250 = sbr.rel (%p248) target = $region36
        $region35: #{tpu_custom_call.1} parent=31 // pred_region
          %s251 = sand.u32 %s43, 1
          %s252 = scalar_lea.sflag [#allocation4], %s251
          %s253 = sand.u32 %s43, 1
          %s254 = smul.addr %s253, 8
          %s255 = scalar_lea.vmem [#allocation3], %s254
          %s257 = ssub.s32 128, 128
          %258 = vsyncadd %s252, %s257
          %s259 = smul.addr %s26, 2
          %s260 = sadd.s32 %s27, %s259
          %s261 = smul.addr %s260, 128
          %s262 = scalar_lea.hbm %s0, %s261
          %s264 = sshll.u32 %s255, 4
          %s265 = int_to_ptr.vmem [resolvable:$true] %s264
          %267 = dma.hbm_to_vmem [thread:$0]  %s262, 128, %s265, %s252
        $region36: #{tpu_custom_call.1} parent=31 // pred_fallthru
          _
        // Predicated region
        $region37: #{tpu_custom_call.1} parent=31 // pred_check
          %p268 = pneg %p79
        $region38: #{tpu_custom_call.1} parent=31 // pred_check_branch
          %270 = sbr.rel (%p268) target = $region40
        $region39: #{tpu_custom_call.1} parent=31 // pred_region
          %s271 = sand.u32 %s19, 1
          %s272 = scalar_lea.sflag [#allocation6], %s271
          %s273 = sand.u32 %s69, 1
          %s274 = smul.addr %s273, 8
          %s275 = scalar_lea.vmem [#allocation5], %s274
          %s277 = ssub.s32 128, 128
          %278 = vsyncadd %s272, %s277
          %s279 = smul.addr %s26, 128
          %s280 = scalar_lea.hbm %s1, %s279
          %s282 = sshll.u32 %s275, 4
          %s283 = int_to_ptr.vmem [resolvable:$true] %s282
          %285 = dma.hbm_to_vmem [thread:$0]  %s280, 128, %s283, %s272
        $region40: #{tpu_custom_call.1} parent=31 // pred_fallthru
          _
      $region32: #{tpu_custom_call.1} parent=5 // pred_fallthru
        _
      %p286 = scmp.le.s32.totalorder 1, %s19
      %p287 = scmp.lt.s32.totalorder %s19, 5
      %p288 = pnand %p286, %p287
      %p289 = pneg %p288
      // Predicated region
      $region41: #{tpu_custom_call.1} parent=5 // pred_check
        _
      $region42: #{tpu_custom_call.1} parent=5 // pred_check_branch
        %291 = sbr.rel (%p288) target = $region44
      $region43: #{tpu_custom_call.1} parent=5 // pred_region
        %s292 = ssub.s32 %s19, 1
        %s293 = sand.u32 %s46, 1
        %s294 = scalar_lea.sflag [#allocation4], %s293
        %s295 = sand.u32 %s46, 1
        %s296 = smul.addr %s295, 8
        %s297 = scalar_lea.vmem [#allocation3], %s296
        // Predicated region
        $region45: #{tpu_custom_call.1} parent=43 // pred_check
          %p298 = pneg %p59
        $region46: #{tpu_custom_call.1} parent=43 // pred_check_branch
          %300 = sbr.rel (%p298) target = $region48
        $region47: #{tpu_custom_call.1} parent=43 // pred_region
          %301 = dma.done %s294, 128
        $region48: #{tpu_custom_call.1} parent=43 // pred_fallthru
          _
        %s302 = sand.u32 %s24, 1
        %s303 = scalar_lea.sflag [#allocation6], %s302
        %s304 = sand.u32 %s72, 1
        %s305 = smul.addr %s304, 8
        %s306 = scalar_lea.vmem [#allocation5], %s305
        // Predicated region
        $region49: #{tpu_custom_call.1} parent=43 // pred_check
          %p307 = pneg %p85
        $region50: #{tpu_custom_call.1} parent=43 // pred_check_branch
          %309 = sbr.rel (%p307) target = $region52
        $region51: #{tpu_custom_call.1} parent=43 // pred_region
          %310 = dma.done %s303, 128
        $region52: #{tpu_custom_call.1} parent=43 // pred_fallthru
          _
        // Predicated region
        $region53: #{tpu_custom_call.1} parent=43 // pred_check
          %p311 = pneg %p106
        $region54: #{tpu_custom_call.1} parent=43 // pred_check_branch
          %313 = sbr.rel (%p311) target = $region56
        $region55: #{tpu_custom_call.1} parent=43 // pred_region
          %314 = dma.done [#allocation6], 512
        $region56: #{tpu_custom_call.1} parent=43 // pred_fallthru
          _
        // Predicated region
        $region57: #{tpu_custom_call.1} parent=43 // pred_check
          %p315 = pneg %p148
        $region58: #{tpu_custom_call.1} parent=43 // pred_check_branch
          %317 = sbr.rel (%p315) target = $region60
        $region59: #{tpu_custom_call.1} parent=43 // pred_region
          %318 = dma.done [#allocation9], 512
        $region60: #{tpu_custom_call.1} parent=43 // pred_fallthru
          _
        %s319 = sand.u32 %s46, 1
        %s320 = scalar_lea.sflag [#allocation4], %s319
        %s321 = sand.u32 %s46, 1
        %s322 = smul.addr %s321, 8
        %s323 = scalar_lea.vmem [#allocation3], %s322
        %p324 = pneg %p59
        %p325 = pneg %p56
        %s326 = sand.u32 %s24, 1
        %s327 = scalar_lea.sflag [#allocation6], %s326
        %s328 = sand.u32 %s72, 1
        %s329 = smul.addr %s328, 8
        %s330 = scalar_lea.vmem [#allocation5], %s329
        %p331 = pneg %p85
        %p332 = pneg %p82
        %p333 = pneg %p106
        %p334 = pneg %p103
        %p335 = pneg %p127
        %p336 = pneg %p124
        %p337 = pneg %p148
        %p338 = pneg %p145
        %p339 = pneg %p169
        %p340 = pneg %p166
        %p341 = pneg %p197
        %p342 = pneg %p194
        %s343 = sand.u32 %s184, 1
        %s344 = sand.u32 %s184, 1
        %s345 = smul.addr %s344, 32
        %s346 = scalar_lea.vmem [#allocation10], %s345
        %p347 = scmp.eq.s32.totalorder %s29, 0
        // Predicated region
        $region61: #{tpu_custom_call.1} parent=43 // pred_check
          %p348 = pneg %p347
        $region62: #{tpu_custom_call.1} parent=43 // pred_check_branch
          %350 = sbr.rel (%p348) target = $region64
        $region63: #{tpu_custom_call.1} parent=43 // pred_region
          %v351 = vld [vmem:[%s306] sm:$0xff]
          %v352 = vld [vmem:[#allocation8] sm:$0xff]
          %v353 = vld [vmem:[#allocation8 + $0x8] sm:$0xff]
          %v354 = vld [vmem:[#allocation8 + $0x10] sm:$0xff]
          %v355 = vld [vmem:[#allocation8 + $0x18] sm:$0xff]
          %v356 = vld [vmem:[%s5] sm:$0x1]
          %v358 = vlaneseq
          %v359 = vshrl.u32 %v358, 7
          %v360 = vsub.s32 0, %v359
          %v361 = vrot.slane %v356, %v360
          %vm363 = vcmask 261120
          %v365 = vsel %vm363, %v351, 0
          %367 = vmatprep.subr.mxu0 0.0
          %368 = vmatpush1.msra.mxu0 0.0
          %369 = vmatprep.subr.mxu0 0.0
          %370 = vmatpush1.msra.mxu0 0.0
          %371 = vmatprep.subr.mxu0 0.0
          %372 = vmatpush1.msra.mxu0 0.0
          %373 = vmatprep.subr.mxu0 0.0
          %374 = vmatpush1.msra.mxu0 0.0
          %375 = vmatprep.subr.mxu0 0.0
          %376 = vmatpush1.msra.mxu0 0.0
          %377 = vmatprep.subr.mxu0 0.0
          %378 = vmatpush1.msra.mxu0 0.0
          %379 = vmatprep.subr.mxu0 0.0
          %380 = vmatpush1.msra.mxu0 0.0
          %381 = vmatprep.subr.mxu0 0.0
          %382 = vmatpush1.msra.mxu0 0.0
          %383 = vmatprep.subr.mxu0 0.0
          %384 = vmatpush1.msra.mxu0 0.0
          %385 = vmatprep.subr.mxu0 0.0
          %386 = vmatpush1.msra.mxu0 0.0
          %387 = vmatprep.subr.mxu0 0.0
          %388 = vmatpush1.msra.mxu0 0.0
          %389 = vmatprep.subr.mxu0 0.0
          %390 = vmatpush1.msra.mxu0 0.0
          %391 = vmatprep.subr.mxu0 0.0
          %392 = vmatpush1.msra.mxu0 %v355
          %393 = vmatprep.subr.mxu0 0.0
          %394 = vmatpush1.msra.mxu0 %v354
          %395 = vmatprep.subr.mxu0 0.0
          %396 = vmatpush1.msra.mxu0 %v353
          %397 = vmatprep.subr.mxu0 0.0
          %398 = vmatpush1.msra.mxu0 %v352
          %399 = vmatprep.subr.mxu0 0.0
          %400 = vmatpush2.msra.mxu0 0.0
          %401 = vmatprep.subr.mxu0 0.0
          %402 = vmatpush2.msra.mxu0 0.0
          %403 = vmatprep.subr.mxu0 0.0
          %404 = vmatpush2.msra.mxu0 0.0
          %405 = vmatprep.subr.mxu0 0.0
          %406 = vmatpush2.msra.mxu0 0.0
          %407 = vmatprep.subr.mxu0 0.0
          %408 = vmatpush2.msra.mxu0 0.0
          %409 = vmatprep.subr.mxu0 0.0
          %410 = vmatpush2.msra.mxu0 0.0
          %411 = vmatprep.subr.mxu0 0.0
          %412 = vmatpush2.msra.mxu0 0.0
          %413 = vmatprep.subr.mxu0 0.0
          %414 = vmatpush2.msra.mxu0 0.0
          %415 = vmatprep.subr.mxu0 0.0
          %416 = vmatpush2.msra.mxu0 0.0
          %417 = vmatprep.subr.mxu0 0.0
          %418 = vmatpush2.msra.mxu0 0.0
          %419 = vmatprep.subr.mxu0 0.0
          %420 = vmatpush2.msra.mxu0 0.0
          %421 = vmatprep.subr.mxu0 0.0
          %422 = vmatpush2.msra.mxu0 0.0
          %423 = vmatprep.subr.mxu0 0.0
          %424 = vmatpush2.msra.mxu0 0.0
          %425 = vmatprep.subr.mxu0 0.0
          %426 = vmatpush2.msra.mxu0 0.0
          %427 = vmatprep.subr.mxu0 0.0
          %428 = vmatpush2.msra.mxu0 0.0
          %429 = vmatprep.subr.mxu0 0.0
          %430 = vmatpush2.msra.mxu0 0.0
          %431 = vmatprep.mubr.f32.mxu0 0.0
          %432 = vmatmul.mubr.f32.gmra.mxu0 %v365
          %v433 = vpop.f32.mrf.mxu0
          %v434 = vadd.f32 %v361, %v433
          %v435 = vpop.f32.mrf.mxu0
          %436 = vdwg.mxu0
          %437 = vst.msk [vmem:[#allocation2] sm:$0xff] %vm363, %v434
        $region64: #{tpu_custom_call.1} parent=43 // pred_fallthru
          _
        %v438 = vld [vmem:[%s297] sm:$0xff]
        %v439 = vld [vmem:[#allocation7] sm:$0xff]
        %v440 = vld [vmem:[#allocation7 + $0x8] sm:$0xff]
        %v441 = vld [vmem:[#allocation7 + $0x10] sm:$0xff]
        %v442 = vld [vmem:[#allocation7 + $0x18] sm:$0xff]
        %v443 = vld [vmem:[%s3] sm:$0x1]
        %v445 = vlaneseq
        %v446 = vshrl.u32 %v445, 7
        %v447 = vsub.s32 0, %v446
        %v448 = vrot.slane %v443, %v447
        %vm450 = vcmask 261120
        %v452 = vsel %vm450, %v438, 0
        %454 = vmatprep.subr.mxu0 0.0
        %455 = vmatpush1.msra.mxu0 0.0
        %456 = vmatprep.subr.mxu0 0.0
        %457 = vmatpush1.msra.mxu0 0.0
        %458 = vmatprep.subr.mxu0 0.0
        %459 = vmatpush1.msra.mxu0 0.0
        %460 = vmatprep.subr.mxu0 0.0
        %461 = vmatpush1.msra.mxu0 0.0
        %462 = vmatprep.subr.mxu0 0.0
        %463 = vmatpush1.msra.mxu0 0.0
        %464 = vmatprep.subr.mxu0 0.0
        %465 = vmatpush1.msra.mxu0 0.0
        %466 = vmatprep.subr.mxu0 0.0
        %467 = vmatpush1.msra.mxu0 0.0
        %468 = vmatprep.subr.mxu0 0.0
        %469 = vmatpush1.msra.mxu0 0.0
        %470 = vmatprep.subr.mxu0 0.0
        %471 = vmatpush1.msra.mxu0 0.0
        %472 = vmatprep.subr.mxu0 0.0
        %473 = vmatpush1.msra.mxu0 0.0
        %474 = vmatprep.subr.mxu0 0.0
        %475 = vmatpush1.msra.mxu0 0.0
        %476 = vmatprep.subr.mxu0 0.0
        %477 = vmatpush1.msra.mxu0 0.0
        %478 = vmatprep.subr.mxu0 0.0
        %479 = vmatpush1.msra.mxu0 %v442
        %480 = vmatprep.subr.mxu0 0.0
        %481 = vmatpush1.msra.mxu0 %v441
        %482 = vmatprep.subr.mxu0 0.0
        %483 = vmatpush1.msra.mxu0 %v440
        %484 = vmatprep.subr.mxu0 0.0
        %485 = vmatpush1.msra.mxu0 %v439
        %486 = vmatprep.subr.mxu0 0.0
        %487 = vmatpush2.msra.mxu0 0.0
        %488 = vmatprep.subr.mxu0 0.0
        %489 = vmatpush2.msra.mxu0 0.0
        %490 = vmatprep.subr.mxu0 0.0
        %491 = vmatpush2.msra.mxu0 0.0
        %492 = vmatprep.subr.mxu0 0.0
        %493 = vmatpush2.msra.mxu0 0.0
        %494 = vmatprep.subr.mxu0 0.0
        %495 = vmatpush2.msra.mxu0 0.0
        %496 = vmatprep.subr.mxu0 0.0
        %497 = vmatpush2.msra.mxu0 0.0
        %498 = vmatprep.subr.mxu0 0.0
        %499 = vmatpush2.msra.mxu0 0.0
        %500 = vmatprep.subr.mxu0 0.0
        %501 = vmatpush2.msra.mxu0 0.0
        %502 = vmatprep.subr.mxu0 0.0
        %503 = vmatpush2.msra.mxu0 0.0
        %504 = vmatprep.subr.mxu0 0.0
        %505 = vmatpush2.msra.mxu0 0.0
        %506 = vmatprep.subr.mxu0 0.0
        %507 = vmatpush2.msra.mxu0 0.0
        %508 = vmatprep.subr.mxu0 0.0
        %509 = vmatpush2.msra.mxu0 0.0
        %510 = vmatprep.subr.mxu0 0.0
        %511 = vmatpush2.msra.mxu0 0.0
        %512 = vmatprep.subr.mxu0 0.0
        %513 = vmatpush2.msra.mxu0 0.0
        %514 = vmatprep.subr.mxu0 0.0
        %515 = vmatpush2.msra.mxu0 0.0
        %516 = vmatprep.subr.mxu0 0.0
        %517 = vmatpush2.msra.mxu0 0.0
        %518 = vmatprep.mubr.f32.mxu0 0.0
        %519 = vmatmul.mubr.f32.gmra.mxu0 %v452
        %v520 = vpop.f32.mrf.mxu0
        %v521 = vadd.f32 %v448, %v520
        %v522 = vpop.f32.mrf.mxu0
        %523 = vdwg.mxu0
        %v524 = vld [vmem:[#allocation2] sm:$0xff]
        %vm525 = vcmask 64512
        %v527 = vsel %vm525, %v521, 0
        %v530 = vsel %vm525, %v524, 0
        %532 = vmatprep.subr.mxu0 0.0
        %533 = vmatpush1.xpose.msra.mxu0 0.0
        %534 = vmatprep.subr.mxu0 0.0
        %535 = vmatpush1.xpose.msra.mxu0 0.0
        %536 = vmatprep.subr.mxu0 0.0
        %537 = vmatpush1.xpose.msra.mxu0 0.0
        %538 = vmatprep.subr.mxu0 0.0
        %539 = vmatpush1.xpose.msra.mxu0 0.0
        %540 = vmatprep.subr.mxu0 0.0
        %541 = vmatpush1.xpose.msra.mxu0 0.0
        %542 = vmatprep.subr.mxu0 0.0
        %543 = vmatpush1.xpose.msra.mxu0 0.0
        %544 = vmatprep.subr.mxu0 0.0
        %545 = vmatpush1.xpose.msra.mxu0 0.0
        %546 = vmatprep.subr.mxu0 0.0
        %547 = vmatpush1.xpose.msra.mxu0 0.0
        %548 = vmatprep.subr.mxu0 0.0
        %549 = vmatpush1.xpose.msra.mxu0 0.0
        %550 = vmatprep.subr.mxu0 0.0
        %551 = vmatpush1.xpose.msra.mxu0 0.0
        %552 = vmatprep.subr.mxu0 0.0
        %553 = vmatpush1.xpose.msra.mxu0 0.0
        %554 = vmatprep.subr.mxu0 0.0
        %555 = vmatpush1.xpose.msra.mxu0 0.0
        %556 = vmatprep.subr.mxu0 0.0
        %557 = vmatpush1.xpose.msra.mxu0 0.0
        %558 = vmatprep.subr.mxu0 0.0
        %559 = vmatpush1.xpose.msra.mxu0 0.0
        %560 = vmatprep.subr.mxu0 0.0
        %561 = vmatpush1.xpose.msra.mxu0 0.0
        %562 = vmatprep.subr.mxu0 0.0
        %563 = vmatpush1.xpose.msra.mxu0 %v530
        %564 = vmatprep.subr.mxu0 0.0
        %565 = vmatpush2.xpose.msra.mxu0 0.0
        %566 = vmatprep.subr.mxu0 0.0
        %567 = vmatpush2.xpose.msra.mxu0 0.0
        %568 = vmatprep.subr.mxu0 0.0
        %569 = vmatpush2.xpose.msra.mxu0 0.0
        %570 = vmatprep.subr.mxu0 0.0
        %571 = vmatpush2.xpose.msra.mxu0 0.0
        %572 = vmatprep.subr.mxu0 0.0
        %573 = vmatpush2.xpose.msra.mxu0 0.0
        %574 = vmatprep.subr.mxu0 0.0
        %575 = vmatpush2.xpose.msra.mxu0 0.0
        %576 = vmatprep.subr.mxu0 0.0
        %577 = vmatpush2.xpose.msra.mxu0 0.0
        %578 = vmatprep.subr.mxu0 0.0
        %579 = vmatpush2.xpose.msra.mxu0 0.0
        %580 = vmatprep.subr.mxu0 0.0
        %581 = vmatpush2.xpose.msra.mxu0 0.0
        %582 = vmatprep.subr.mxu0 0.0
        %583 = vmatpush2.xpose.msra.mxu0 0.0
        %584 = vmatprep.subr.mxu0 0.0
        %585 = vmatpush2.xpose.msra.mxu0 0.0
        %586 = vmatprep.subr.mxu0 0.0
        %587 = vmatpush2.xpose.msra.mxu0 0.0
        %588 = vmatprep.subr.mxu0 0.0
        %589 = vmatpush2.xpose.msra.mxu0 0.0
        %590 = vmatprep.subr.mxu0 0.0
        %591 = vmatpush2.xpose.msra.mxu0 0.0
        %592 = vmatprep.subr.mxu0 0.0
        %593 = vmatpush2.xpose.msra.mxu0 0.0
        %594 = vmatprep.subr.mxu0 0.0
        %595 = vmatpush2.xpose.msra.mxu0 0.0
        %596 = vmatprep.mubr.f32.mxu0 0.0
        %597 = vmatmul.mubr.f32.gmra.mxu0 %v527
        %v598 = vpop.f32.mrf.mxu0
        %v599 = vadd.f32 0.0, %v598
        %v600 = vpop.f32.mrf.mxu0
        %601 = vdwg.mxu0
        %602 = vst.msk [vmem:[%s346] sm:$0xff] %vm525, %v599
        %603 = vrot.lane.b32.xlu0 %v521, 120
        %v604 = vpop.permute.xlu0 %603
        %605 = vrot.lane.b32.xlu0 %v524, 120
        %v606 = vpop.permute.xlu0 %605
        %v607 = vsel %vm525, %v604, 0
        %v609 = vsel %vm525, %v606, 0
        %611 = vmatprep.subr.mxu0 0.0
        %612 = vmatpush1.xpose.msra.mxu0 0.0
        %613 = vmatprep.subr.mxu0 0.0
        %614 = vmatpush1.xpose.msra.mxu0 0.0
        %615 = vmatprep.subr.mxu0 0.0
        %616 = vmatpush1.xpose.msra.mxu0 0.0
        %617 = vmatprep.subr.mxu0 0.0
        %618 = vmatpush1.xpose.msra.mxu0 0.0
        %619 = vmatprep.subr.mxu0 0.0
        %620 = vmatpush1.xpose.msra.mxu0 0.0
        %621 = vmatprep.subr.mxu0 0.0
        %622 = vmatpush1.xpose.msra.mxu0 0.0
        %623 = vmatprep.subr.mxu0 0.0
        %624 = vmatpush1.xpose.msra.mxu0 0.0
        %625 = vmatprep.subr.mxu0 0.0
        %626 = vmatpush1.xpose.msra.mxu0 0.0
        %627 = vmatprep.subr.mxu0 0.0
        %628 = vmatpush1.xpose.msra.mxu0 0.0
        %629 = vmatprep.subr.mxu0 0.0
        %630 = vmatpush1.xpose.msra.mxu0 0.0
        %631 = vmatprep.subr.mxu0 0.0
        %632 = vmatpush1.xpose.msra.mxu0 0.0
        %633 = vmatprep.subr.mxu0 0.0
        %634 = vmatpush1.xpose.msra.mxu0 0.0
        %635 = vmatprep.subr.mxu0 0.0
        %636 = vmatpush1.xpose.msra.mxu0 0.0
        %637 = vmatprep.subr.mxu0 0.0
        %638 = vmatpush1.xpose.msra.mxu0 0.0
        %639 = vmatprep.subr.mxu0 0.0
        %640 = vmatpush1.xpose.msra.mxu0 0.0
        %641 = vmatprep.subr.mxu0 0.0
        %642 = vmatpush1.xpose.msra.mxu0 %v609
        %643 = vmatprep.subr.mxu0 0.0
        %644 = vmatpush2.xpose.msra.mxu0 0.0
        %645 = vmatprep.subr.mxu0 0.0
        %646 = vmatpush2.xpose.msra.mxu0 0.0
        %647 = vmatprep.subr.mxu0 0.0
        %648 = vmatpush2.xpose.msra.mxu0 0.0
        %649 = vmatprep.subr.mxu0 0.0
        %650 = vmatpush2.xpose.msra.mxu0 0.0
        %651 = vmatprep.subr.mxu0 0.0
        %652 = vmatpush2.xpose.msra.mxu0 0.0
        %653 = vmatprep.subr.mxu0 0.0
        %654 = vmatpush2.xpose.msra.mxu0 0.0
        %655 = vmatprep.subr.mxu0 0.0
        %656 = vmatpush2.xpose.msra.mxu0 0.0
        %657 = vmatprep.subr.mxu0 0.0
        %658 = vmatpush2.xpose.msra.mxu0 0.0
        %659 = vmatprep.subr.mxu0 0.0
        %660 = vmatpush2.xpose.msra.mxu0 0.0
        %661 = vmatprep.subr.mxu0 0.0
        %662 = vmatpush2.xpose.msra.mxu0 0.0
        %663 = vmatprep.subr.mxu0 0.0
        %664 = vmatpush2.xpose.msra.mxu0 0.0
        %665 = vmatprep.subr.mxu0 0.0
        %666 = vmatpush2.xpose.msra.mxu0 0.0
        %667 = vmatprep.subr.mxu0 0.0
        %668 = vmatpush2.xpose.msra.mxu0 0.0
        %669 = vmatprep.subr.mxu0 0.0
        %670 = vmatpush2.xpose.msra.mxu0 0.0
        %671 = vmatprep.subr.mxu0 0.0
        %672 = vmatpush2.xpose.msra.mxu0 0.0
        %673 = vmatprep.subr.mxu0 0.0
        %674 = vmatpush2.xpose.msra.mxu0 0.0
        %675 = vmatprep.mubr.f32.mxu0 0.0
        %676 = vmatmul.mubr.f32.gmra.mxu0 %v607
        %v677 = vpop.f32.mrf.mxu0
        %v678 = vadd.f32 0.0, %v677
        %v679 = vpop.f32.mrf.mxu0
        %680 = vdwg.mxu0
        %s681 = scalar_lea.vmem %s346, 8 [#allocation10]
        %682 = vst.msk [vmem:[%s681] sm:$0xff] %vm525, %v678
        %683 = vrot.lane.b32.xlu0 %v521, 112
        %v684 = vpop.permute.xlu0 %683
        %685 = vrot.lane.b32.xlu0 %v524, 112
        %v686 = vpop.permute.xlu0 %685
        %v687 = vsel %vm525, %v684, 0
        %v689 = vsel %vm525, %v686, 0
        %691 = vmatprep.subr.mxu0 0.0
        %692 = vmatpush1.xpose.msra.mxu0 0.0
        %693 = vmatprep.subr.mxu0 0.0
        %694 = vmatpush1.xpose.msra.mxu0 0.0
        %695 = vmatprep.subr.mxu0 0.0
        %696 = vmatpush1.xpose.msra.mxu0 0.0
        %697 = vmatprep.subr.mxu0 0.0
        %698 = vmatpush1.xpose.msra.mxu0 0.0
        %699 = vmatprep.subr.mxu0 0.0
        %700 = vmatpush1.xpose.msra.mxu0 0.0
        %701 = vmatprep.subr.mxu0 0.0
        %702 = vmatpush1.xpose.msra.mxu0 0.0
        %703 = vmatprep.subr.mxu0 0.0
        %704 = vmatpush1.xpose.msra.mxu0 0.0
        %705 = vmatprep.subr.mxu0 0.0
        %706 = vmatpush1.xpose.msra.mxu0 0.0
        %707 = vmatprep.subr.mxu0 0.0
        %708 = vmatpush1.xpose.msra.mxu0 0.0
        %709 = vmatprep.subr.mxu0 0.0
        %710 = vmatpush1.xpose.msra.mxu0 0.0
        %711 = vmatprep.subr.mxu0 0.0
        %712 = vmatpush1.xpose.msra.mxu0 0.0
        %713 = vmatprep.subr.mxu0 0.0
        %714 = vmatpush1.xpose.msra.mxu0 0.0
        %715 = vmatprep.subr.mxu0 0.0
        %716 = vmatpush1.xpose.msra.mxu0 0.0
        %717 = vmatprep.subr.mxu0 0.0
        %718 = vmatpush1.xpose.msra.mxu0 0.0
        %719 = vmatprep.subr.mxu0 0.0
        %720 = vmatpush1.xpose.msra.mxu0 0.0
        %721 = vmatprep.subr.mxu0 0.0
        %722 = vmatpush1.xpose.msra.mxu0 %v689
        %723 = vmatprep.subr.mxu0 0.0
        %724 = vmatpush2.xpose.msra.mxu0 0.0
        %725 = vmatprep.subr.mxu0 0.0
        %726 = vmatpush2.xpose.msra.mxu0 0.0
        %727 = vmatprep.subr.mxu0 0.0
        %728 = vmatpush2.xpose.msra.mxu0 0.0
        %729 = vmatprep.subr.mxu0 0.0
        %730 = vmatpush2.xpose.msra.mxu0 0.0
        %731 = vmatprep.subr.mxu0 0.0
        %732 = vmatpush2.xpose.msra.mxu0 0.0
        %733 = vmatprep.subr.mxu0 0.0
        %734 = vmatpush2.xpose.msra.mxu0 0.0
        %735 = vmatprep.subr.mxu0 0.0
        %736 = vmatpush2.xpose.msra.mxu0 0.0
        %737 = vmatprep.subr.mxu0 0.0
        %738 = vmatpush2.xpose.msra.mxu0 0.0
        %739 = vmatprep.subr.mxu0 0.0
        %740 = vmatpush2.xpose.msra.mxu0 0.0
        %741 = vmatprep.subr.mxu0 0.0
        %742 = vmatpush2.xpose.msra.mxu0 0.0
        %743 = vmatprep.subr.mxu0 0.0
        %744 = vmatpush2.xpose.msra.mxu0 0.0
        %745 = vmatprep.subr.mxu0 0.0
        %746 = vmatpush2.xpose.msra.mxu0 0.0
        %747 = vmatprep.subr.mxu0 0.0
        %748 = vmatpush2.xpose.msra.mxu0 0.0
        %749 = vmatprep.subr.mxu0 0.0
        %750 = vmatpush2.xpose.msra.mxu0 0.0
        %751 = vmatprep.subr.mxu0 0.0
        %752 = vmatpush2.xpose.msra.mxu0 0.0
        %753 = vmatprep.subr.mxu0 0.0
        %754 = vmatpush2.xpose.msra.mxu0 0.0
        %755 = vmatprep.mubr.f32.mxu0 0.0
        %756 = vmatmul.mubr.f32.gmra.mxu0 %v687
        %v757 = vpop.f32.mrf.mxu0
        %v758 = vadd.f32 0.0, %v757
        %v759 = vpop.f32.mrf.mxu0
        %760 = vdwg.mxu0
        %s761 = scalar_lea.vmem %s346, 16 [#allocation10]
        %762 = vst.msk [vmem:[%s761] sm:$0xff] %vm525, %v758
        %763 = vrot.lane.b32.xlu0 %v521, 104
        %v764 = vpop.permute.xlu0 %763
        %765 = vrot.lane.b32.xlu0 %v524, 104
        %v766 = vpop.permute.xlu0 %765
        %v767 = vsel %vm525, %v764, 0
        %v769 = vsel %vm525, %v766, 0
        %771 = vmatprep.subr.mxu0 0.0
        %772 = vmatpush1.xpose.msra.mxu0 0.0
        %773 = vmatprep.subr.mxu0 0.0
        %774 = vmatpush1.xpose.msra.mxu0 0.0
        %775 = vmatprep.subr.mxu0 0.0
        %776 = vmatpush1.xpose.msra.mxu0 0.0
        %777 = vmatprep.subr.mxu0 0.0
        %778 = vmatpush1.xpose.msra.mxu0 0.0
        %779 = vmatprep.subr.mxu0 0.0
        %780 = vmatpush1.xpose.msra.mxu0 0.0
        %781 = vmatprep.subr.mxu0 0.0
        %782 = vmatpush1.xpose.msra.mxu0 0.0
        %783 = vmatprep.subr.mxu0 0.0
        %784 = vmatpush1.xpose.msra.mxu0 0.0
        %785 = vmatprep.subr.mxu0 0.0
        %786 = vmatpush1.xpose.msra.mxu0 0.0
        %787 = vmatprep.subr.mxu0 0.0
        %788 = vmatpush1.xpose.msra.mxu0 0.0
        %789 = vmatprep.subr.mxu0 0.0
        %790 = vmatpush1.xpose.msra.mxu0 0.0
        %791 = vmatprep.subr.mxu0 0.0
        %792 = vmatpush1.xpose.msra.mxu0 0.0
        %793 = vmatprep.subr.mxu0 0.0
        %794 = vmatpush1.xpose.msra.mxu0 0.0
        %795 = vmatprep.subr.mxu0 0.0
        %796 = vmatpush1.xpose.msra.mxu0 0.0
        %797 = vmatprep.subr.mxu0 0.0
        %798 = vmatpush1.xpose.msra.mxu0 0.0
        %799 = vmatprep.subr.mxu0 0.0
        %800 = vmatpush1.xpose.msra.mxu0 0.0
        %801 = vmatprep.subr.mxu0 0.0
        %802 = vmatpush1.xpose.msra.mxu0 %v769
        %803 = vmatprep.subr.mxu0 0.0
        %804 = vmatpush2.xpose.msra.mxu0 0.0
        %805 = vmatprep.subr.mxu0 0.0
        %806 = vmatpush2.xpose.msra.mxu0 0.0
        %807 = vmatprep.subr.mxu0 0.0
        %808 = vmatpush2.xpose.msra.mxu0 0.0
        %809 = vmatprep.subr.mxu0 0.0
        %810 = vmatpush2.xpose.msra.mxu0 0.0
        %811 = vmatprep.subr.mxu0 0.0
        %812 = vmatpush2.xpose.msra.mxu0 0.0
        %813 = vmatprep.subr.mxu0 0.0
        %814 = vmatpush2.xpose.msra.mxu0 0.0
        %815 = vmatprep.subr.mxu0 0.0
        %816 = vmatpush2.xpose.msra.mxu0 0.0
        %817 = vmatprep.subr.mxu0 0.0
        %818 = vmatpush2.xpose.msra.mxu0 0.0
        %819 = vmatprep.subr.mxu0 0.0
        %820 = vmatpush2.xpose.msra.mxu0 0.0
        %821 = vmatprep.subr.mxu0 0.0
        %822 = vmatpush2.xpose.msra.mxu0 0.0
        %823 = vmatprep.subr.mxu0 0.0
        %824 = vmatpush2.xpose.msra.mxu0 0.0
        %825 = vmatprep.subr.mxu0 0.0
        %826 = vmatpush2.xpose.msra.mxu0 0.0
        %827 = vmatprep.subr.mxu0 0.0
        %828 = vmatpush2.xpose.msra.mxu0 0.0
        %829 = vmatprep.subr.mxu0 0.0
        %830 = vmatpush2.xpose.msra.mxu0 0.0
        %831 = vmatprep.subr.mxu0 0.0
        %832 = vmatpush2.xpose.msra.mxu0 0.0
        %833 = vmatprep.subr.mxu0 0.0
        %834 = vmatpush2.xpose.msra.mxu0 0.0
        %835 = vmatprep.mubr.f32.mxu0 0.0
        %836 = vmatmul.mubr.f32.gmra.mxu0 %v767
        %v837 = vpop.f32.mrf.mxu0
        %v838 = vadd.f32 0.0, %v837
        %v839 = vpop.f32.mrf.mxu0
        %840 = vdwg.mxu0
        %s841 = scalar_lea.vmem %s346, 24 [#allocation10]
        %842 = vst.msk [vmem:[%s841] sm:$0xff] %vm525, %v838
        %s843 = sand.u32 %s184, 1
        %s844 = sand.u32 %s184, 1
        %s845 = smul.addr %s844, 32
        %s846 = scalar_lea.vmem [#allocation10], %s845
        // Predicated region
        $region65: #{tpu_custom_call.1} parent=43 // pred_check
          %p847 = pneg %p194
        $region66: #{tpu_custom_call.1} parent=43 // pred_check_branch
          %849 = sbr.rel (%p847) target = $region68
        $region67: #{tpu_custom_call.1} parent=43 // pred_region
          %s850 = smul.addr %s28, 8
          %s851 = sadd.s32 %s29, %s850
          %s852 = smul.addr %s851, 8
          %s853 = scalar_lea.vmem %s6, %s852
          // Predicated region
          $region69: #{tpu_custom_call.1} parent=67 // pred_check
            _
          $region70: #{tpu_custom_call.1} parent=67 // pred_check_branch
            %855 = sbr.rel (0) target = $region72
          $region71: #{tpu_custom_call.1} parent=67 // pred_region
            // Predicated region
            $region73: #{tpu_custom_call.1} parent=71 // pred_check
              _
            $region74: #{tpu_custom_call.1} parent=71 // pred_check_branch
              %857 = sbr.rel (0) target = $region76
            $region75: #{tpu_custom_call.1} parent=71 // pred_region
              // Predicated region
              $region88: #{tpu_custom_call.1} parent=75 // pred_check
                _
              $region89: #{tpu_custom_call.1} parent=75 // pred_check_branch
                %879 = sbr.rel (0) target = $region91
              $region90: #{tpu_custom_call.1} parent=75 // pred_region
                loop: start=0, step=1, limit=1
                $region92: #{tpu_custom_call.1} parent=90 // loop_pre_header
                  _
                $region93: #{tpu_custom_call.1} parent=90 // loop_header
                  %s881 = sphi 0, %s885
                  %p882 = scmp.ge.s32.totalorder %s881, 1
                  %s886 = sphi %s846, %s846
                  %s887 = sphi %s853, %s853
                $region94: #{tpu_custom_call.1} parent=90 // loop_header_branch
                  %884 = sbr.rel (%p882) target = $region98
                $region95: #{tpu_custom_call.1} parent=90 // loop_body
                  %v888 = vld [vmem:[%s886] sm:$0xff]
                  %889 = vst [vmem:[%s887] sm:$0xff] %v888
                  %v890 = vld [vmem:[%s886 + $0x8] sm:$0xff]
                  %891 = vst [vmem:[%s887 + $0x10] sm:$0xff] %v890
                  %v892 = vld [vmem:[%s886 + $0x10] sm:$0xff]
                  %893 = vst [vmem:[%s887 + $0x20] sm:$0xff] %v892
                  %v894 = vld [vmem:[%s886 + $0x18] sm:$0xff]
                  %895 = vst [vmem:[%s887 + $0x30] sm:$0xff] %v894
                $region96: #{tpu_custom_call.1} parent=90 // loop_footer
                  %s885 = sadd.s32 1, %s881
                $region97: #{tpu_custom_call.1} parent=90 // loop_footer_branch
                  %880 = sbr.rel target = $region93
                $region98: #{tpu_custom_call.1} parent=90 // loop_exit
                  _
              $region91: #{tpu_custom_call.1} parent=75 // pred_fallthru
                _
              // Predicated region
              $region99: #{tpu_custom_call.1} parent=75 // pred_check
                _
              $region100: #{tpu_custom_call.1} parent=75 // pred_check_branch
                %897 = sbr.rel target = $region102
              $region101: #{tpu_custom_call.1} parent=75 // pred_region
                _
              $region102: #{tpu_custom_call.1} parent=75 // pred_fallthru
                _
            $region76: #{tpu_custom_call.1} parent=71 // pred_fallthru
              _
            // Predicated region
            $region77: #{tpu_custom_call.1} parent=71 // pred_check
              _
            $region78: #{tpu_custom_call.1} parent=71 // pred_check_branch
              %859 = sbr.rel target = $region80
            $region79: #{tpu_custom_call.1} parent=71 // pred_region
              %s861 = ssub.s32 256, 1
              loop: start=0, step=1, limit=1
              $region81: #{tpu_custom_call.1} parent=79 // loop_pre_header
                _
              $region82: #{tpu_custom_call.1} parent=79 // loop_header
                %s863 = sphi 0, %s867
                %p864 = scmp.ge.s32.totalorder %s863, 1
                %s868 = sphi %s846, %s846
                %s869 = sphi %s853, %s853
              $region83: #{tpu_custom_call.1} parent=79 // loop_header_branch
                %866 = sbr.rel (%p864) target = $region87
              $region84: #{tpu_custom_call.1} parent=79 // loop_body
                %v870 = vld [vmem:[%s868] sm:%s861]
                %871 = vst [vmem:[%s869] sm:%s861] %v870
                %v872 = vld [vmem:[%s868 + $0x8] sm:%s861]
                %873 = vst [vmem:[%s869 + $0x10] sm:%s861] %v872
                %v874 = vld [vmem:[%s868 + $0x10] sm:%s861]
                %875 = vst [vmem:[%s869 + $0x20] sm:%s861] %v874
                %v876 = vld [vmem:[%s868 + $0x18] sm:%s861]
                %877 = vst [vmem:[%s869 + $0x30] sm:%s861] %v876
              $region85: #{tpu_custom_call.1} parent=79 // loop_footer
                %s867 = sadd.s32 1, %s863
              $region86: #{tpu_custom_call.1} parent=79 // loop_footer_branch
                %862 = sbr.rel target = $region82
              $region87: #{tpu_custom_call.1} parent=79 // loop_exit
                _
            $region80: #{tpu_custom_call.1} parent=71 // pred_fallthru
              _
          $region72: #{tpu_custom_call.1} parent=67 // pred_fallthru
            _
          %898 = vnop
        $region68: #{tpu_custom_call.1} parent=43 // pred_fallthru
          _
      $region44: #{tpu_custom_call.1} parent=5 // pred_fallthru
        _
      %p899 = scmp.le.s32.totalorder 2, %s19
      // Predicated region
      $region103: #{tpu_custom_call.1} parent=5 // pred_check
        %p900 = pneg %p899
      $region104: #{tpu_custom_call.1} parent=5 // pred_check_branch
        %902 = sbr.rel (%p900) target = $region106
      $region105: #{tpu_custom_call.1} parent=5 // pred_region
        %s903 = ssub.s32 %s19, 2
        // Predicated region
        $region107: #{tpu_custom_call.1} parent=105 // pred_check
          %p904 = pneg %p200
        $region108: #{tpu_custom_call.1} parent=105 // pred_check_branch
          %906 = sbr.rel (%p904) target = $region110
        $region109: #{tpu_custom_call.1} parent=105 // pred_region
          %s907 = sand.u32 %s185, 1
          %s908 = sand.u32 %s185, 1
          %s909 = smul.addr %s908, 32
          %s910 = scalar_lea.vmem [#allocation10], %s909
        $region110: #{tpu_custom_call.1} parent=105 // pred_fallthru
          _
      $region106: #{tpu_custom_call.1} parent=5 // pred_fallthru
        _
    $region6: #{tpu_custom_call.1} parent=1 // loop_footer
      %s23 = sadd.s32 1, %s19
    $region7: #{tpu_custom_call.1} parent=1 // loop_footer_branch
      %18 = sbr.rel target = $region3
    $region8: #{tpu_custom_call.1} parent=1 // loop_exit
      _
    %911 = vsyncpa [#allocation4], 1
    %s912 = scalar_lea.sflag [#allocation4], 1
    %913 = vsyncpa %s912, 1
    %914 = vsyncpa [#allocation6], 1
    %s915 = scalar_lea.sflag [#allocation6], 1
    %916 = vsyncpa %s915, 1
    %917 = vsyncpa [#allocation9], 1

</llo_original>
